<compile_context>
chip_gen: v7x
topology: tpu7x:2x2x1
jax: 0.10.0
libtpu: 0.0.40
codegen_flags: <defaults>
</compile_context>

<pallas_src>
import functools
import math

import jax
import jax.numpy as jnp
from jax.experimental import pallas as pl
from jax.experimental.pallas import tpu as pltpu


def _round_up(x, m):
    return ((x + m - 1) // m) * m


def _softplus(x):
    # numerically-stable softplus; exp/log1p hit the EUP, max/abs the VPU
    return jnp.maximum(x, 0.0) + jnp.log1p(jnp.exp(-jnp.abs(x)))


def _vmem_limit_bytes():
    """Generation-aware scoped-VMEM limit (~75% of physical VMEM)."""
    cap = 64 * 1024 * 1024
    try:
        info = pltpu.get_tpu_info()
        cap = int(getattr(info, "vmem_capacity_bytes", cap) or cap)
    except Exception:
        pass
    return max(32 * 1024 * 1024, (cap * 3) // 4)


# --------------------------------------------------------------------------
# Likelihood kernel: grid over batch blocks, in-kernel embedding gather via
# scalar-prefetched indices + per-row DMAs from HBM, fused pos/neg Bernoulli
# path, per-block partial log-likelihood outputs ("parallel" semantics).
# --------------------------------------------------------------------------
def _ll_kernel(ctx_idx_ref, tgt_idx_ref, ctx_w_ref, tgt_w_ref, out_ref,
               cbuf, tbuf, sem, *, batch, block_b, n_ctx, n_tgt):
    i = pl.program_id(0)
    base = i * block_b

    # Issue all row-gather DMAs for this batch block (HBM table -> VMEM).
    @pl.loop(0, block_b)
    def _issue(r):
        g = base + r
        for c in range(n_ctx):
            idx = ctx_idx_ref[g * n_ctx + c]
            pltpu.make_async_copy(
                ctx_w_ref.at[pl.ds(idx, 1)],
                cbuf.at[pl.ds(c * block_b + r, 1)],
                sem.at[0]).start()
        for s in range(n_tgt):
            idx = tgt_idx_ref[g * n_tgt + s]
            pltpu.make_async_copy(
                tgt_w_ref.at[pl.ds(idx, 1)],
                tbuf.at[pl.ds(s * block_b + r, 1)],
                sem.at[0]).start()

    # Mirrored waits (same transfer sizes / same semaphore) for every copy.
    @pl.loop(0, block_b)
    def _drain(r):
        for c in range(n_ctx):
            pltpu.make_async_copy(
                ctx_w_ref.at[pl.ds(0, 1)],
                cbuf.at[pl.ds(c * block_b + r, 1)],
                sem.at[0]).wait()
        for s in range(n_tgt):
            pltpu.make_async_copy(
                tgt_w_ref.at[pl.ds(0, 1)],
                tbuf.at[pl.ds(s * block_b + r, 1)],
                sem.at[0]).wait()

    # ctx_sum[b, :] = sum_c ctx_emb[b, c, :]       (block_b is the sublane axis)
    ctx_sum = cbuf[0:block_b]                                   # (bb, K)
    for c in range(1, n_ctx):
        ctx_sum = ctx_sum + cbuf[c * block_b:(c + 1) * block_b]

    if batch % block_b != 0:
        # padded batch rows gather valid row 0; their contribution is masked
        rid = base + jax.lax.broadcasted_iota(jnp.int32, (block_b, 1), 0)
        valid = rid < batch
    else:
        valid = None

    total_nll = jnp.float32(0.0)
    for s in range(n_tgt):
        tgt_s = tbuf[s * block_b:(s + 1) * block_b]             # (bb, K)
        eta = jnp.sum(tgt_s * ctx_sum, axis=-1, keepdims=True)  # (bb, 1)
        # Bernoulli(logits=eta).log_prob: y=1 -> -softplus(-eta); y=0 -> -softplus(eta)
        nll = _softplus(-eta) if s == 0 else _softplus(eta)
        if valid is not None:
            nll = jnp.where(valid, nll, 0.0)
        total_nll = total_nll + jnp.sum(nll)

    # lane-dense per-block partial of the summed log-likelihood
    out_ref[...] = jnp.full(out_ref.shape, -total_nll, jnp.float32)


def _log_likelihood(ctx_w, tgt_w, ctx_idx_flat, tgt_idx_flat, *,
                    batch, block_b, n_ctx, n_tgt):
    k = ctx_w.shape[1]
    b_pad = ctx_idx_flat.shape[0] // n_ctx
    nb = b_pad // block_b

    kernel = functools.partial(_ll_kernel, batch=batch, block_b=block_b,
                               n_ctx=n_ctx, n_tgt=n_tgt)
    grid_spec = pltpu.PrefetchScalarGridSpec(
        num_scalar_prefetch=2,                 # ctx_idx_flat, tgt_idx_flat -> SMEM
        grid=(nb,),
        in_specs=[
            pl.BlockSpec(memory_space=pl.ANY),  # ctx_w stays in HBM
            pl.BlockSpec(memory_space=pl.ANY),  # tgt_w stays in HBM
        ],
        out_specs=pl.BlockSpec((1, 8, 128), lambda i, *_: (i, 0, 0)),
        scratch_shapes=[
            pltpu.VMEM((n_ctx * block_b, k), jnp.float32),
            pltpu.VMEM((n_tgt * block_b, k), jnp.float32),
            pltpu.SemaphoreType.DMA((1,)),
        ],
    )
    out = pl.pallas_call(
        kernel,
        out_shape=jax.ShapeDtypeStruct((nb, 8, 128), jnp.float32),
        grid_spec=grid_spec,
        compiler_params=pltpu.CompilerParams(
            dimension_semantics=("parallel",),   # independent per-block partials
            vmem_limit_bytes=_vmem_limit_bytes(),
        ),
    )(ctx_idx_flat, tgt_idx_flat, ctx_w, tgt_w)
    return jnp.sum(out[:, 0, 0])


# --------------------------------------------------------------------------
# Prior kernel: one call streams BOTH tables (lane-dense views), per-block
# sum-of-squares partials, masked ragged edges.
# --------------------------------------------------------------------------
def _prior_kernel(a_ref, b_ref, out_ref, *, n_a, a_rows, a_block,
                  b_rows, b_block):
    i = pl.program_id(0)

    @pl.when(i < n_a)
    def _table_a():
        w = a_ref[...]
        if a_rows % a_block != 0:       # static: mask loads on the ragged edge
            rid = i * a_block + jax.lax.broadcasted_iota(jnp.int32, w.shape, 0)
            w = jnp.where(rid < a_rows, w, 0.0)
        out_ref[...] = jnp.full(out_ref.shape, jnp.sum(w * w), jnp.float32)

    @pl.when(i >= n_a)
    def _table_b():
        w = b_ref[...]
        if b_rows % b_block != 0:
            rid = ((i - n_a) * b_block
                   + jax.lax.broadcasted_iota(jnp.int32, w.shape, 0))
            w = jnp.where(rid < b_rows, w, 0.0)
        out_ref[...] = jnp.full(out_ref.shape, jnp.sum(w * w), jnp.float32)


def _lane_dense_view(w):
    """Free (contiguous) reshape to a lane-dense 2-D view when divisible."""
    rows, k = w.shape
    n = rows * k
    for width in (512, 256, 128):
        if n % width == 0:
            return w.reshape(n // width, width)
    return w                            # last dim == full width: still legal


def _rows_per_block(rows, width, target_bytes):
    padded_w = max(128, _round_up(width, 128))      # padded VMEM footprint
    br = target_bytes // (padded_w * 4)
    br = max(8, (br // 8) * 8)
    return rows if br >= rows else br


def _prior_sum_sq(ctx_w, tgt_w, *, block_bytes):
    a = _lane_dense_view(ctx_w)
    b = _lane_dense_view(tgt_w)
    a_rows, a_w = a.shape
    b_rows, b_w = b.shape
    a_br = _rows_per_block(a_rows, a_w, block_bytes)
    b_br = _rows_per_block(b_rows, b_w, block_bytes)
    n_a = pl.cdiv(a_rows, a_br)
    n_b = pl.cdiv(b_rows, b_br)

    kernel = functools.partial(_prior_kernel, n_a=n_a, a_rows=a_rows,
                               a_block=a_br, b_rows=b_rows, b_block=b_br)
    out = pl.pallas_call(
        kernel,
        out_shape=jax.ShapeDtypeStruct((n_a + n_b, 8, 128), jnp.float32),
        grid=(n_a + n_b,),
        in_specs=[
            # clamped index maps: the inactive table's block index is constant,
            # so Pallas does not re-fetch it (no wasted HBM traffic).
            pl.BlockSpec((a_br, a_w), lambda i: (jnp.minimum(i, n_a - 1), 0)),
            pl.BlockSpec((b_br, b_w), lambda i: (jnp.maximum(i - n_a, 0), 0)),
        ],
        out_specs=pl.BlockSpec((1, 8, 128), lambda i: (i, 0, 0)),
        compiler_params=pltpu.CompilerParams(
            dimension_semantics=("parallel",),
            vmem_limit_bytes=_vmem_limit_bytes(),
        ),
    )(a, b)
    return jnp.sum(out[:, 0, 0])


# --------------------------------------------------------------------------
# Forward (replicates model.forward; returns a (1,)-shaped loss like PyTorch).
# --------------------------------------------------------------------------
def bern_emb_forward(ctx_w, tgt_w, contexts, targets, neg_idx, *,
                     n_epochs, sig, block_b=None,
                     prior_block_bytes=4 * 1024 * 1024):
    batch, n_ctx = contexts.shape
    n_neg = neg_idx.shape[1]
    n_tgt = 1 + n_neg
    k = ctx_w.shape[1]

    # Batch block sized from the PADDED VMEM footprint of the gather buffers.
    if block_b is None:
        k_pad = max(128, _round_up(k, 128))
        bb = (4 * 1024 * 1024) // ((n_ctx + n_tgt) * k_pad * 4)
        bb = max(8, min(2048, (bb // 8) * 8))
    else:
        bb = max(8, _round_up(block_b, 8))
    bb = min(bb, _round_up(batch, 8))
    nb = pl.cdiv(batch, bb)
    b_pad = nb * bb

    # Indices go to SMEM via scalar prefetch (flattened 1-D: avoids SMEM 2-D
    # padding blowup).  PyTorch's weight.data reassignment overwrites the
    # padding row too, so context index L is a plain lookup here as well.
    # Batch is padded with valid index 0 rows whose contribution is masked,
    # so the kernel never reads out-of-bounds data.
    ctx_idx = contexts.astype(jnp.int32)
    tgt_idx = jnp.concatenate(
        [targets.reshape(-1, 1).astype(jnp.int32), neg_idx.astype(jnp.int32)],
        axis=1)
    if b_pad != batch:
        pad = b_pad - batch
        ctx_idx = jnp.pad(ctx_idx, ((0, pad), (0, 0)))
        tgt_idx = jnp.pad(tgt_idx, ((0, pad), (0, 0)))

    ll = _log_likelihood(ctx_w, tgt_w, ctx_idx.reshape(-1), tgt_idx.reshape(-1),
                         batch=batch, block_b=bb, n_ctx=n_ctx, n_tgt=n_tgt)

    # Normal(0, sig) prior with the per-element constant hoisted (exact rewrite).
    ssq = _prior_sum_sq(ctx_w, tgt_w, block_bytes=prior_block_bytes)
    numel = ctx_w.size + tgt_w.size
    sig_f = jnp.float32(sig)
    log_const = -jnp.log(sig_f) - 0.5 * jnp.float32(math.log(2.0 * math.pi))
    log_prior = -0.5 * ssq / (sig_f * sig_f) + jnp.float32(numel) * log_const

    loss = -(jnp.float32(n_epochs) * ll + log_prior)
    return loss.reshape(1)


def sample_neg_idx(key, unigram, bsize, ns):
    # TODO(synk): torch.multinomial (without replacement) has no Pallas
    # equivalent; sampled in plain JAX via the Gumbel top-k trick.
    log_probs = jax.nn.log_softmax(unigram)
    g = jax.random.gumbel(key, (bsize, unigram.shape[0]), dtype=jnp.float32)
    _, idx = jax.lax.top_k(log_probs[None, :] + g, ns)
    return idx.astype(jnp.int32)


def _reference_loss(ctx_w, tgt_w, contexts, targets, neg_idx, *, n_epochs, sig):
    """Pure-JAX reference of the PyTorch forward for correctness checking."""
    pos_ctx = jnp.take(ctx_w, contexts, axis=0)
    pos_tgt = jnp.take(tgt_w, targets.reshape(-1), axis=0)
    neg_tgt = jnp.take(tgt_w, neg_idx, axis=0)
    ctx_sum = jnp.sum(pos_ctx, axis=1)
    pos_eta = jnp.sum(pos_tgt * ctx_sum, axis=-1)
    neg_eta = jnp.sum(neg_tgt * ctx_sum[:, None, :], axis=-1)
    ll = -jnp.sum(jax.nn.softplus(-pos_eta)) - jnp.sum(jax.nn.softplus(neg_eta))
    log_const = -jnp.log(jnp.float32(sig)) - 0.5 * jnp.log(jnp.float32(2.0) * jnp.pi)
    lp = (jnp.sum(-0.5 * (ctx_w / sig) ** 2 + log_const)
          + jnp.sum(-0.5 * (tgt_w / sig) ** 2 + log_const))
    return jnp.reshape(-(jnp.float32(n_epochs) * ll + lp), (1,))


if __name__ == "__main__":
    # Small shapes consistent with the module's forward.
    K = 32             # embedding dim
    L = 64             # vocab size (unigram length)
    bsize = 12         # n_train — deliberately NOT a multiple of the batch block
    context_size = 4
    ns = 8             # number of negative samples
    n_epochs = 3
    sig = 1.0

    key = jax.random.PRNGKey(0)
    k_uni, k_tgt, k_ctx, k_c, k_t, k_neg = jax.random.split(key, 6)

    # Deterministic parameter init mirroring torch.randn(...) / K
    unigram = jax.random.uniform(k_uni, (L,), dtype=jnp.float32)
    tgt_w = jax.random.normal(k_tgt, (L, K), dtype=jnp.float32) / K        # target_embed
    ctx_w = jax.random.normal(k_ctx, (L + 1, K), dtype=jnp.float32) / K    # context_embed

    contexts = jax.random.randint(k_c, (bsize, context_size), 0, L + 1, dtype=jnp.int32)
    targets = jax.random.randint(k_t, (bsize, 1), 0, L, dtype=jnp.int32)
    neg_idx = sample_neg_idx(k_neg, unigram, bsize, ns)

    ref = _reference_loss(ctx_w, tgt_w, contexts, targets, neg_idx,
                          n_epochs=n_epochs, sig=sig)

    # Small blocks: exercises multi-step grids, batch padding/masking in the
    # likelihood kernel and the ragged prior edge block.
    loss_small = bern_emb_forward(ctx_w, tgt_w, contexts, targets, neg_idx,
                                  n_epochs=n_epochs, sig=sig,
                                  block_b=8, prior_block_bytes=4096)
    # Default (auto) block sizing path.
    loss_auto = bern_emb_forward(ctx_w, tgt_w, contexts, targets, neg_idx,
                                 n_epochs=n_epochs, sig=sig)
    jax.block_until_ready((loss_small, loss_auto))

    for loss in (loss_small, loss_auto):
        assert loss.shape == (1,) and bool(jnp.isfinite(loss).all())
        assert jnp.allclose(loss, ref, rtol=2e-5, atol=1e-2), (loss, ref)
    print("KERNEL_OK")
</pallas_src>

<mosaic_0001>
module attributes {stable_mosaic.version = 11 : i64} {
  func.func @_ll_kernel(%arg0: i32, %arg1: memref<64xi32, #tpu.memory_space<smem>>, %arg2: memref<144xi32, #tpu.memory_space<smem>>, %arg3: memref<65x32xf32, #tpu.memory_space<any>>, %arg4: memref<64x32xf32, #tpu.memory_space<any>>, %arg5: memref<1x8x128xf32, #tpu.memory_space<vmem>>, %arg6: memref<32x32xf32, #tpu.memory_space<vmem>>, %arg7: memref<72x32xf32, #tpu.memory_space<vmem>>, %arg8: memref<1x!tpu.dma_semaphore, #tpu.memory_space<semaphore_mem>>) attributes {dimension_semantics = [#tpu.dimension_semantics<parallel>], iteration_bounds = array<i64: 2>, scalar_prefetch = 2 : i64, scratch_operands = 3 : i64, tpu.core_type = #tpu.core_type<tc>, window_params = [{}, {}, {transform_indices = @transform_2, window_bounds = array<i64: 1, 8, 128>}]} {
    %c8_i32 = arith.constant 8 : i32
    %0 = arith.muli %arg0, %c8_i32 : i32
    %c0_i32 = arith.constant 0 : i32
    %c8_i32_0 = arith.constant 8 : i32
    %1 = arith.addi %c0_i32, %c8_i32_0 : i32
    %c1_i32 = arith.constant 1 : i32
    scf.for %arg9 = %c0_i32 to %1 step %c1_i32  : i32 {
      %c1_i32_73 = arith.constant 1 : i32
      %191 = arith.muli %arg9, %c1_i32_73 : i32
      %c0_i32_74 = arith.constant 0 : i32
      %192 = arith.addi %c0_i32_74, %191 : i32
      %193 = arith.addi %0, %192 : i32
      %c4_i32 = arith.constant 4 : i32
      %194 = arith.muli %193, %c4_i32 : i32
      %c0_i32_75 = arith.constant 0 : i32
      %195 = arith.addi %194, %c0_i32_75 : i32
      %196 = arith.index_cast %195 : i32 to index
      %197 = memref.load %arg1[%196] : memref<64xi32, #tpu.memory_space<smem>>
      %c0_i32_76 = arith.constant 0 : i32
      %198 = arith.addi %c0_i32_76, %192 : i32
      %c0_i32_77 = arith.constant 0 : i32
      %c0_i32_78 = arith.constant 0 : i32
      %199 = tpu.memref_slice %arg3[%197, %c0_i32_78] : memref<65x32xf32, #tpu.memory_space<any>> -> memref<1x32xf32, #tpu.memory_space<any>>
      %c0_i32_79 = arith.constant 0 : i32
      %200 = tpu.memref_slice %arg6[%198, %c0_i32_79] : memref<32x32xf32, #tpu.memory_space<vmem>> -> memref<1x32xf32, #tpu.memory_space<vmem>>
      %201 = tpu.memref_slice %arg8[%c0_i32_77] : memref<1x!tpu.dma_semaphore, #tpu.memory_space<semaphore_mem>> -> memref<1x!tpu.dma_semaphore, #tpu.memory_space<semaphore_mem>>
      %202 = tpu.memref_squeeze %201 : memref<1x!tpu.dma_semaphore, #tpu.memory_space<semaphore_mem>> -> memref<!tpu.dma_semaphore, #tpu.memory_space<semaphore_mem>>
      tpu.enqueue_dma source(%199 : memref<1x32xf32, #tpu.memory_space<any>>) target(%200 : memref<1x32xf32, #tpu.memory_space<vmem>>) target_semaphore(%202 : memref<!tpu.dma_semaphore, #tpu.memory_space<semaphore_mem>>)
      %c4_i32_80 = arith.constant 4 : i32
      %203 = arith.muli %193, %c4_i32_80 : i32
      %c1_i32_81 = arith.constant 1 : i32
      %204 = arith.addi %203, %c1_i32_81 : i32
      %205 = arith.index_cast %204 : i32 to index
      %206 = memref.load %arg1[%205] : memref<64xi32, #tpu.memory_space<smem>>
      %c8_i32_82 = arith.constant 8 : i32
      %207 = arith.addi %c8_i32_82, %192 : i32
      %c0_i32_83 = arith.constant 0 : i32
      %c0_i32_84 = arith.constant 0 : i32
      %208 = tpu.memref_slice %arg3[%206, %c0_i32_84] : memref<65x32xf32, #tpu.memory_space<any>> -> memref<1x32xf32, #tpu.memory_space<any>>
      %c0_i32_85 = arith.constant 0 : i32
      %209 = tpu.memref_slice %arg6[%207, %c0_i32_85] : memref<32x32xf32, #tpu.memory_space<vmem>> -> memref<1x32xf32, #tpu.memory_space<vmem>>
      %210 = tpu.memref_slice %arg8[%c0_i32_83] : memref<1x!tpu.dma_semaphore, #tpu.memory_space<semaphore_mem>> -> memref<1x!tpu.dma_semaphore, #tpu.memory_space<semaphore_mem>>
      %211 = tpu.memref_squeeze %210 : memref<1x!tpu.dma_semaphore, #tpu.memory_space<semaphore_mem>> -> memref<!tpu.dma_semaphore, #tpu.memory_space<semaphore_mem>>
      tpu.enqueue_dma source(%208 : memref<1x32xf32, #tpu.memory_space<any>>) target(%209 : memref<1x32xf32, #tpu.memory_space<vmem>>) target_semaphore(%211 : memref<!tpu.dma_semaphore, #tpu.memory_space<semaphore_mem>>)
      %c4_i32_86 = arith.constant 4 : i32
      %212 = arith.muli %193, %c4_i32_86 : i32
      %c2_i32 = arith.constant 2 : i32
      %213 = arith.addi %212, %c2_i32 : i32
      %214 = arith.index_cast %213 : i32 to index
      %215 = memref.load %arg1[%214] : memref<64xi32, #tpu.memory_space<smem>>
      %c16_i32 = arith.constant 16 : i32
      %216 = arith.addi %c16_i32, %192 : i32
      %c0_i32_87 = arith.constant 0 : i32
      %c0_i32_88 = arith.constant 0 : i32
      %217 = tpu.memref_slice %arg3[%215, %c0_i32_88] : memref<65x32xf32, #tpu.memory_space<any>> -> memref<1x32xf32, #tpu.memory_space<any>>
      %c0_i32_89 = arith.constant 0 : i32
      %218 = tpu.memref_slice %arg6[%216, %c0_i32_89] : memref<32x32xf32, #tpu.memory_space<vmem>> -> memref<1x32xf32, #tpu.memory_space<vmem>>
      %219 = tpu.memref_slice %arg8[%c0_i32_87] : memref<1x!tpu.dma_semaphore, #tpu.memory_space<semaphore_mem>> -> memref<1x!tpu.dma_semaphore, #tpu.memory_space<semaphore_mem>>
      %220 = tpu.memref_squeeze %219 : memref<1x!tpu.dma_semaphore, #tpu.memory_space<semaphore_mem>> -> memref<!tpu.dma_semaphore, #tpu.memory_space<semaphore_mem>>
      tpu.enqueue_dma source(%217 : memref<1x32xf32, #tpu.memory_space<any>>) target(%218 : memref<1x32xf32, #tpu.memory_space<vmem>>) target_semaphore(%220 : memref<!tpu.dma_semaphore, #tpu.memory_space<semaphore_mem>>)
      %c4_i32_90 = arith.constant 4 : i32
      %221 = arith.muli %193, %c4_i32_90 : i32
      %c3_i32 = arith.constant 3 : i32
      %222 = arith.addi %221, %c3_i32 : i32
      %223 = arith.index_cast %222 : i32 to index
      %224 = memref.load %arg1[%223] : memref<64xi32, #tpu.memory_space<smem>>
      %c24_i32 = arith.constant 24 : i32
      %225 = arith.addi %c24_i32, %192 : i32
      %c0_i32_91 = arith.constant 0 : i32
      %c0_i32_92 = arith.constant 0 : i32
      %226 = tpu.memref_slice %arg3[%224, %c0_i32_92] : memref<65x32xf32, #tpu.memory_space<any>> -> memref<1x32xf32, #tpu.memory_space<any>>
      %c0_i32_93 = arith.constant 0 : i32
      %227 = tpu.memref_slice %arg6[%225, %c0_i32_93] : memref<32x32xf32, #tpu.memory_space<vmem>> -> memref<1x32xf32, #tpu.memory_space<vmem>>
      %228 = tpu.memref_slice %arg8[%c0_i32_91] : memref<1x!tpu.dma_semaphore, #tpu.memory_space<semaphore_mem>> -> memref<1x!tpu.dma_semaphore, #tpu.memory_space<semaphore_mem>>
      %229 = tpu.memref_squeeze %228 : memref<1x!tpu.dma_semaphore, #tpu.memory_space<semaphore_mem>> -> memref<!tpu.dma_semaphore, #tpu.memory_space<semaphore_mem>>
      tpu.enqueue_dma source(%226 : memref<1x32xf32, #tpu.memory_space<any>>) target(%227 : memref<1x32xf32, #tpu.memory_space<vmem>>) target_semaphore(%229 : memref<!tpu.dma_semaphore, #tpu.memory_space<semaphore_mem>>)
      %c9_i32 = arith.constant 9 : i32
      %230 = arith.muli %193, %c9_i32 : i32
      %c0_i32_94 = arith.constant 0 : i32
      %231 = arith.addi %230, %c0_i32_94 : i32
      %232 = arith.index_cast %231 : i32 to index
      %233 = memref.load %arg2[%232] : memref<144xi32, #tpu.memory_space<smem>>
      %c0_i32_95 = arith.constant 0 : i32
      %234 = arith.addi %c0_i32_95, %192 : i32
      %c0_i32_96 = arith.constant 0 : i32
      %c0_i32_97 = arith.constant 0 : i32
      %235 = tpu.memref_slice %arg4[%233, %c0_i32_97] : memref<64x32xf32, #tpu.memory_space<any>> -> memref<1x32xf32, #tpu.memory_space<any>>
      %c0_i32_98 = arith.constant 0 : i32
      %236 = tpu.memref_slice %arg7[%234, %c0_i32_98] : memref<72x32xf32, #tpu.memory_space<vmem>> -> memref<1x32xf32, #tpu.memory_space<vmem>>
      %237 = tpu.memref_slice %arg8[%c0_i32_96] : memref<1x!tpu.dma_semaphore, #tpu.memory_space<semaphore_mem>> -> memref<1x!tpu.dma_semaphore, #tpu.memory_space<semaphore_mem>>
      %238 = tpu.memref_squeeze %237 : memref<1x!tpu.dma_semaphore, #tpu.memory_space<semaphore_mem>> -> memref<!tpu.dma_semaphore, #tpu.memory_space<semaphore_mem>>
      tpu.enqueue_dma source(%235 : memref<1x32xf32, #tpu.memory_space<any>>) target(%236 : memref<1x32xf32, #tpu.memory_space<vmem>>) target_semaphore(%238 : memref<!tpu.dma_semaphore, #tpu.memory_space<semaphore_mem>>)
      %c9_i32_99 = arith.constant 9 : i32
      %239 = arith.muli %193, %c9_i32_99 : i32
      %c1_i32_100 = arith.constant 1 : i32
      %240 = arith.addi %239, %c1_i32_100 : i32
      %241 = arith.index_cast %240 : i32 to index
      %242 = memref.load %arg2[%241] : memref<144xi32, #tpu.memory_space<smem>>
      %c8_i32_101 = arith.constant 8 : i32
      %243 = arith.addi %c8_i32_101, %192 : i32
      %c0_i32_102 = arith.constant 0 : i32
      %c0_i32_103 = arith.constant 0 : i32
      %244 = tpu.memref_slice %arg4[%242, %c0_i32_103] : memref<64x32xf32, #tpu.memory_space<any>> -> memref<1x32xf32, #tpu.memory_space<any>>
      %c0_i32_104 = arith.constant 0 : i32
      %245 = tpu.memref_slice %arg7[%243, %c0_i32_104] : memref<72x32xf32, #tpu.memory_space<vmem>> -> memref<1x32xf32, #tpu.memory_space<vmem>>
      %246 = tpu.memref_slice %arg8[%c0_i32_102] : memref<1x!tpu.dma_semaphore, #tpu.memory_space<semaphore_mem>> -> memref<1x!tpu.dma_semaphore, #tpu.memory_space<semaphore_mem>>
      %247 = tpu.memref_squeeze %246 : memref<1x!tpu.dma_semaphore, #tpu.memory_space<semaphore_mem>> -> memref<!tpu.dma_semaphore, #tpu.memory_space<semaphore_mem>>
      tpu.enqueue_dma source(%244 : memref<1x32xf32, #tpu.memory_space<any>>) target(%245 : memref<1x32xf32, #tpu.memory_space<vmem>>) target_semaphore(%247 : memref<!tpu.dma_semaphore, #tpu.memory_space<semaphore_mem>>)
      %c9_i32_105 = arith.constant 9 : i32
      %248 = arith.muli %193, %c9_i32_105 : i32
      %c2_i32_106 = arith.constant 2 : i32
      %249 = arith.addi %248, %c2_i32_106 : i32
      %250 = arith.index_cast %249 : i32 to index
      %251 = memref.load %arg2[%250] : memref<144xi32, #tpu.memory_space<smem>>
      %c16_i32_107 = arith.constant 16 : i32
      %252 = arith.addi %c16_i32_107, %192 : i32
      %c0_i32_108 = arith.constant 0 : i32
      %c0_i32_109 = arith.constant 0 : i32
      %253 = tpu.memref_slice %arg4[%251, %c0_i32_109] : memref<64x32xf32, #tpu.memory_space<any>> -> memref<1x32xf32, #tpu.memory_space<any>>
      %c0_i32_110 = arith.constant 0 : i32
      %254 = tpu.memref_slice %arg7[%252, %c0_i32_110] : memref<72x32xf32, #tpu.memory_space<vmem>> -> memref<1x32xf32, #tpu.memory_space<vmem>>
      %255 = tpu.memref_slice %arg8[%c0_i32_108] : memref<1x!tpu.dma_semaphore, #tpu.memory_space<semaphore_mem>> -> memref<1x!tpu.dma_semaphore, #tpu.memory_space<semaphore_mem>>
      %256 = tpu.memref_squeeze %255 : memref<1x!tpu.dma_semaphore, #tpu.memory_space<semaphore_mem>> -> memref<!tpu.dma_semaphore, #tpu.memory_space<semaphore_mem>>
      tpu.enqueue_dma source(%253 : memref<1x32xf32, #tpu.memory_space<any>>) target(%254 : memref<1x32xf32, #tpu.memory_space<vmem>>) target_semaphore(%256 : memref<!tpu.dma_semaphore, #tpu.memory_space<semaphore_mem>>)
      %c9_i32_111 = arith.constant 9 : i32
      %257 = arith.muli %193, %c9_i32_111 : i32
      %c3_i32_112 = arith.constant 3 : i32
      %258 = arith.addi %257, %c3_i32_112 : i32
      %259 = arith.index_cast %258 : i32 to index
      %260 = memref.load %arg2[%259] : memref<144xi32, #tpu.memory_space<smem>>
      %c24_i32_113 = arith.constant 24 : i32
      %261 = arith.addi %c24_i32_113, %192 : i32
      %c0_i32_114 = arith.constant 0 : i32
      %c0_i32_115 = arith.constant 0 : i32
      %262 = tpu.memref_slice %arg4[%260, %c0_i32_115] : memref<64x32xf32, #tpu.memory_space<any>> -> memref<1x32xf32, #tpu.memory_space<any>>
      %c0_i32_116 = arith.constant 0 : i32
      %263 = tpu.memref_slice %arg7[%261, %c0_i32_116] : memref<72x32xf32, #tpu.memory_space<vmem>> -> memref<1x32xf32, #tpu.memory_space<vmem>>
      %264 = tpu.memref_slice %arg8[%c0_i32_114] : memref<1x!tpu.dma_semaphore, #tpu.memory_space<semaphore_mem>> -> memref<1x!tpu.dma_semaphore, #tpu.memory_space<semaphore_mem>>
      %265 = tpu.memref_squeeze %264 : memref<1x!tpu.dma_semaphore, #tpu.memory_space<semaphore_mem>> -> memref<!tpu.dma_semaphore, #tpu.memory_space<semaphore_mem>>
      tpu.enqueue_dma source(%262 : memref<1x32xf32, #tpu.memory_space<any>>) target(%263 : memref<1x32xf32, #tpu.memory_space<vmem>>) target_semaphore(%265 : memref<!tpu.dma_semaphore, #tpu.memory_space<semaphore_mem>>)
      %c9_i32_117 = arith.constant 9 : i32
      %266 = arith.muli %193, %c9_i32_117 : i32
      %c4_i32_118 = arith.constant 4 : i32
      %267 = arith.addi %266, %c4_i32_118 : i32
      %268 = arith.index_cast %267 : i32 to index
      %269 = memref.load %arg2[%268] : memref<144xi32, #tpu.memory_space<smem>>
      %c32_i32 = arith.constant 32 : i32
      %270 = arith.addi %c32_i32, %192 : i32
      %c0_i32_119 = arith.constant 0 : i32
      %c0_i32_120 = arith.constant 0 : i32
      %271 = tpu.memref_slice %arg4[%269, %c0_i32_120] : memref<64x32xf32, #tpu.memory_space<any>> -> memref<1x32xf32, #tpu.memory_space<any>>
      %c0_i32_121 = arith.constant 0 : i32
      %272 = tpu.memref_slice %arg7[%270, %c0_i32_121] : memref<72x32xf32, #tpu.memory_space<vmem>> -> memref<1x32xf32, #tpu.memory_space<vmem>>
      %273 = tpu.memref_slice %arg8[%c0_i32_119] : memref<1x!tpu.dma_semaphore, #tpu.memory_space<semaphore_mem>> -> memref<1x!tpu.dma_semaphore, #tpu.memory_space<semaphore_mem>>
      %274 = tpu.memref_squeeze %273 : memref<1x!tpu.dma_semaphore, #tpu.memory_space<semaphore_mem>> -> memref<!tpu.dma_semaphore, #tpu.memory_space<semaphore_mem>>
      tpu.enqueue_dma source(%271 : memref<1x32xf32, #tpu.memory_space<any>>) target(%272 : memref<1x32xf32, #tpu.memory_space<vmem>>) target_semaphore(%274 : memref<!tpu.dma_semaphore, #tpu.memory_space<semaphore_mem>>)
      %c9_i32_122 = arith.constant 9 : i32
      %275 = arith.muli %193, %c9_i32_122 : i32
      %c5_i32 = arith.constant 5 : i32
      %276 = arith.addi %275, %c5_i32 : i32
      %277 = arith.index_cast %276 : i32 to index
      %278 = memref.load %arg2[%277] : memref<144xi32, #tpu.memory_space<smem>>
      %c40_i32 = arith.constant 40 : i32
      %279 = arith.addi %c40_i32, %192 : i32
      %c0_i32_123 = arith.constant 0 : i32
      %c0_i32_124 = arith.constant 0 : i32
      %280 = tpu.memref_slice %arg4[%278, %c0_i32_124] : memref<64x32xf32, #tpu.memory_space<any>> -> memref<1x32xf32, #tpu.memory_space<any>>
      %c0_i32_125 = arith.constant 0 : i32
      %281 = tpu.memref_slice %arg7[%279, %c0_i32_125] : memref<72x32xf32, #tpu.memory_space<vmem>> -> memref<1x32xf32, #tpu.memory_space<vmem>>
      %282 = tpu.memref_slice %arg8[%c0_i32_123] : memref<1x!tpu.dma_semaphore, #tpu.memory_space<semaphore_mem>> -> memref<1x!tpu.dma_semaphore, #tpu.memory_space<semaphore_mem>>
      %283 = tpu.memref_squeeze %282 : memref<1x!tpu.dma_semaphore, #tpu.memory_space<semaphore_mem>> -> memref<!tpu.dma_semaphore, #tpu.memory_space<semaphore_mem>>
      tpu.enqueue_dma source(%280 : memref<1x32xf32, #tpu.memory_space<any>>) target(%281 : memref<1x32xf32, #tpu.memory_space<vmem>>) target_semaphore(%283 : memref<!tpu.dma_semaphore, #tpu.memory_space<semaphore_mem>>)
      %c9_i32_126 = arith.constant 9 : i32
      %284 = arith.muli %193, %c9_i32_126 : i32
      %c6_i32 = arith.constant 6 : i32
      %285 = arith.addi %284, %c6_i32 : i32
      %286 = arith.index_cast %285 : i32 to index
      %287 = memref.load %arg2[%286] : memref<144xi32, #tpu.memory_space<smem>>
      %c48_i32 = arith.constant 48 : i32
      %288 = arith.addi %c48_i32, %192 : i32
      %c0_i32_127 = arith.constant 0 : i32
      %c0_i32_128 = arith.constant 0 : i32
      %289 = tpu.memref_slice %arg4[%287, %c0_i32_128] : memref<64x32xf32, #tpu.memory_space<any>> -> memref<1x32xf32, #tpu.memory_space<any>>
      %c0_i32_129 = arith.constant 0 : i32
      %290 = tpu.memref_slice %arg7[%288, %c0_i32_129] : memref<72x32xf32, #tpu.memory_space<vmem>> -> memref<1x32xf32, #tpu.memory_space<vmem>>
      %291 = tpu.memref_slice %arg8[%c0_i32_127] : memref<1x!tpu.dma_semaphore, #tpu.memory_space<semaphore_mem>> -> memref<1x!tpu.dma_semaphore, #tpu.memory_space<semaphore_mem>>
      %292 = tpu.memref_squeeze %291 : memref<1x!tpu.dma_semaphore, #tpu.memory_space<semaphore_mem>> -> memref<!tpu.dma_semaphore, #tpu.memory_space<semaphore_mem>>
      tpu.enqueue_dma source(%289 : memref<1x32xf32, #tpu.memory_space<any>>) target(%290 : memref<1x32xf32, #tpu.memory_space<vmem>>) target_semaphore(%292 : memref<!tpu.dma_semaphore, #tpu.memory_space<semaphore_mem>>)
      %c9_i32_130 = arith.constant 9 : i32
      %293 = arith.muli %193, %c9_i32_130 : i32
      %c7_i32 = arith.constant 7 : i32
      %294 = arith.addi %293, %c7_i32 : i32
      %295 = arith.index_cast %294 : i32 to index
      %296 = memref.load %arg2[%295] : memref<144xi32, #tpu.memory_space<smem>>
      %c56_i32 = arith.constant 56 : i32
      %297 = arith.addi %c56_i32, %192 : i32
      %c0_i32_131 = arith.constant 0 : i32
      %c0_i32_132 = arith.constant 0 : i32
      %298 = tpu.memref_slice %arg4[%296, %c0_i32_132] : memref<64x32xf32, #tpu.memory_space<any>> -> memref<1x32xf32, #tpu.memory_space<any>>
      %c0_i32_133 = arith.constant 0 : i32
      %299 = tpu.memref_slice %arg7[%297, %c0_i32_133] : memref<72x32xf32, #tpu.memory_space<vmem>> -> memref<1x32xf32, #tpu.memory_space<vmem>>
      %300 = tpu.memref_slice %arg8[%c0_i32_131] : memref<1x!tpu.dma_semaphore, #tpu.memory_space<semaphore_mem>> -> memref<1x!tpu.dma_semaphore, #tpu.memory_space<semaphore_mem>>
      %301 = tpu.memref_squeeze %300 : memref<1x!tpu.dma_semaphore, #tpu.memory_space<semaphore_mem>> -> memref<!tpu.dma_semaphore, #tpu.memory_space<semaphore_mem>>
      tpu.enqueue_dma source(%298 : memref<1x32xf32, #tpu.memory_space<any>>) target(%299 : memref<1x32xf32, #tpu.memory_space<vmem>>) target_semaphore(%301 : memref<!tpu.dma_semaphore, #tpu.memory_space<semaphore_mem>>)
      %c9_i32_134 = arith.constant 9 : i32
      %302 = arith.muli %193, %c9_i32_134 : i32
      %c8_i32_135 = arith.constant 8 : i32
      %303 = arith.addi %302, %c8_i32_135 : i32
      %304 = arith.index_cast %303 : i32 to index
      %305 = memref.load %arg2[%304] : memref<144xi32, #tpu.memory_space<smem>>
      %c64_i32 = arith.constant 64 : i32
      %306 = arith.addi %c64_i32, %192 : i32
      %c0_i32_136 = arith.constant 0 : i32
      %c0_i32_137 = arith.constant 0 : i32
      %307 = tpu.memref_slice %arg4[%305, %c0_i32_137] : memref<64x32xf32, #tpu.memory_space<any>> -> memref<1x32xf32, #tpu.memory_space<any>>
      %c0_i32_138 = arith.constant 0 : i32
      %308 = tpu.memref_slice %arg7[%306, %c0_i32_138] : memref<72x32xf32, #tpu.memory_space<vmem>> -> memref<1x32xf32, #tpu.memory_space<vmem>>
      %309 = tpu.memref_slice %arg8[%c0_i32_136] : memref<1x!tpu.dma_semaphore, #tpu.memory_space<semaphore_mem>> -> memref<1x!tpu.dma_semaphore, #tpu.memory_space<semaphore_mem>>
      %310 = tpu.memref_squeeze %309 : memref<1x!tpu.dma_semaphore, #tpu.memory_space<semaphore_mem>> -> memref<!tpu.dma_semaphore, #tpu.memory_space<semaphore_mem>>
      tpu.enqueue_dma source(%307 : memref<1x32xf32, #tpu.memory_space<any>>) target(%308 : memref<1x32xf32, #tpu.memory_space<vmem>>) target_semaphore(%310 : memref<!tpu.dma_semaphore, #tpu.memory_space<semaphore_mem>>)
    }
    %c8_i32_1 = arith.constant 8 : i32
    %c0_i32_2 = arith.constant 0 : i32
    %c8_i32_3 = arith.constant 8 : i32
    %2 = arith.addi %c0_i32_2, %c8_i32_3 : i32
    %c1_i32_4 = arith.constant 1 : i32
    scf.for %arg9 = %c0_i32_2 to %2 step %c1_i32_4  : i32 {
      %c1_i32_73 = arith.constant 1 : i32
      %191 = arith.muli %arg9, %c1_i32_73 : i32
      %c0_i32_74 = arith.constant 0 : i32
      %192 = arith.addi %c0_i32_74, %191 : i32
      %c0_i32_75 = arith.constant 0 : i32
      %193 = arith.addi %c0_i32_75, %192 : i32
      %c0_i32_76 = arith.constant 0 : i32
      %c0_i32_77 = arith.constant 0 : i32
      %c0_i32_78 = arith.constant 0 : i32
      %194 = tpu.memref_slice %arg3[%c0_i32_77, %c0_i32_78] : memref<65x32xf32, #tpu.memory_space<any>> -> memref<1x32xf32, #tpu.memory_space<any>>
      %c0_i32_79 = arith.constant 0 : i32
      %195 = tpu.memref_slice %arg6[%193, %c0_i32_79] : memref<32x32xf32, #tpu.memory_space<vmem>> -> memref<1x32xf32, #tpu.memory_space<vmem>>
      %196 = tpu.memref_slice %arg8[%c0_i32_76] : memref<1x!tpu.dma_semaphore, #tpu.memory_space<semaphore_mem>> -> memref<1x!tpu.dma_semaphore, #tpu.memory_space<semaphore_mem>>
      %197 = tpu.memref_squeeze %196 : memref<1x!tpu.dma_semaphore, #tpu.memory_space<semaphore_mem>> -> memref<!tpu.dma_semaphore, #tpu.memory_space<semaphore_mem>>
      tpu.wait_dma2 semaphore(%197 : memref<!tpu.dma_semaphore, #tpu.memory_space<semaphore_mem>>) src(%194 : memref<1x32xf32, #tpu.memory_space<any>>) dst(%195 : memref<1x32xf32, #tpu.memory_space<vmem>>)
      %c8_i32_80 = arith.constant 8 : i32
      %198 = arith.addi %c8_i32_80, %192 : i32
      %c0_i32_81 = arith.constant 0 : i32
      %c0_i32_82 = arith.constant 0 : i32
      %c0_i32_83 = arith.constant 0 : i32
      %199 = tpu.memref_slice %arg3[%c0_i32_82, %c0_i32_83] : memref<65x32xf32, #tpu.memory_space<any>> -> memref<1x32xf32, #tpu.memory_space<any>>
      %c0_i32_84 = arith.constant 0 : i32
      %200 = tpu.memref_slice %arg6[%198, %c0_i32_84] : memref<32x32xf32, #tpu.memory_space<vmem>> -> memref<1x32xf32, #tpu.memory_space<vmem>>
      %201 = tpu.memref_slice %arg8[%c0_i32_81] : memref<1x!tpu.dma_semaphore, #tpu.memory_space<semaphore_mem>> -> memref<1x!tpu.dma_semaphore, #tpu.memory_space<semaphore_mem>>
      %202 = tpu.memref_squeeze %201 : memref<1x!tpu.dma_semaphore, #tpu.memory_space<semaphore_mem>> -> memref<!tpu.dma_semaphore, #tpu.memory_space<semaphore_mem>>
      tpu.wait_dma2 semaphore(%202 : memref<!tpu.dma_semaphore, #tpu.memory_space<semaphore_mem>>) src(%199 : memref<1x32xf32, #tpu.memory_space<any>>) dst(%200 : memref<1x32xf32, #tpu.memory_space<vmem>>)
      %c16_i32 = arith.constant 16 : i32
      %203 = arith.addi %c16_i32, %192 : i32
      %c0_i32_85 = arith.constant 0 : i32
      %c0_i32_86 = arith.constant 0 : i32
      %c0_i32_87 = arith.constant 0 : i32
      %204 = tpu.memref_slice %arg3[%c0_i32_86, %c0_i32_87] : memref<65x32xf32, #tpu.memory_space<any>> -> memref<1x32xf32, #tpu.memory_space<any>>
      %c0_i32_88 = arith.constant 0 : i32
      %205 = tpu.memref_slice %arg6[%203, %c0_i32_88] : memref<32x32xf32, #tpu.memory_space<vmem>> -> memref<1x32xf32, #tpu.memory_space<vmem>>
      %206 = tpu.memref_slice %arg8[%c0_i32_85] : memref<1x!tpu.dma_semaphore, #tpu.memory_space<semaphore_mem>> -> memref<1x!tpu.dma_semaphore, #tpu.memory_space<semaphore_mem>>
      %207 = tpu.memref_squeeze %206 : memref<1x!tpu.dma_semaphore, #tpu.memory_space<semaphore_mem>> -> memref<!tpu.dma_semaphore, #tpu.memory_space<semaphore_mem>>
      tpu.wait_dma2 semaphore(%207 : memref<!tpu.dma_semaphore, #tpu.memory_space<semaphore_mem>>) src(%204 : memref<1x32xf32, #tpu.memory_space<any>>) dst(%205 : memref<1x32xf32, #tpu.memory_space<vmem>>)
      %c24_i32 = arith.constant 24 : i32
      %208 = arith.addi %c24_i32, %192 : i32
      %c0_i32_89 = arith.constant 0 : i32
      %c0_i32_90 = arith.constant 0 : i32
      %c0_i32_91 = arith.constant 0 : i32
      %209 = tpu.memref_slice %arg3[%c0_i32_90, %c0_i32_91] : memref<65x32xf32, #tpu.memory_space<any>> -> memref<1x32xf32, #tpu.memory_space<any>>
      %c0_i32_92 = arith.constant 0 : i32
      %210 = tpu.memref_slice %arg6[%208, %c0_i32_92] : memref<32x32xf32, #tpu.memory_space<vmem>> -> memref<1x32xf32, #tpu.memory_space<vmem>>
      %211 = tpu.memref_slice %arg8[%c0_i32_89] : memref<1x!tpu.dma_semaphore, #tpu.memory_space<semaphore_mem>> -> memref<1x!tpu.dma_semaphore, #tpu.memory_space<semaphore_mem>>
      %212 = tpu.memref_squeeze %211 : memref<1x!tpu.dma_semaphore, #tpu.memory_space<semaphore_mem>> -> memref<!tpu.dma_semaphore, #tpu.memory_space<semaphore_mem>>
      tpu.wait_dma2 semaphore(%212 : memref<!tpu.dma_semaphore, #tpu.memory_space<semaphore_mem>>) src(%209 : memref<1x32xf32, #tpu.memory_space<any>>) dst(%210 : memref<1x32xf32, #tpu.memory_space<vmem>>)
      %c0_i32_93 = arith.constant 0 : i32
      %213 = arith.addi %c0_i32_93, %192 : i32
      %c0_i32_94 = arith.constant 0 : i32
      %c0_i32_95 = arith.constant 0 : i32
      %c0_i32_96 = arith.constant 0 : i32
      %214 = tpu.memref_slice %arg4[%c0_i32_95, %c0_i32_96] : memref<64x32xf32, #tpu.memory_space<any>> -> memref<1x32xf32, #tpu.memory_space<any>>
      %c0_i32_97 = arith.constant 0 : i32
      %215 = tpu.memref_slice %arg7[%213, %c0_i32_97] : memref<72x32xf32, #tpu.memory_space<vmem>> -> memref<1x32xf32, #tpu.memory_space<vmem>>
      %216 = tpu.memref_slice %arg8[%c0_i32_94] : memref<1x!tpu.dma_semaphore, #tpu.memory_space<semaphore_mem>> -> memref<1x!tpu.dma_semaphore, #tpu.memory_space<semaphore_mem>>
      %217 = tpu.memref_squeeze %216 : memref<1x!tpu.dma_semaphore, #tpu.memory_space<semaphore_mem>> -> memref<!tpu.dma_semaphore, #tpu.memory_space<semaphore_mem>>
      tpu.wait_dma2 semaphore(%217 : memref<!tpu.dma_semaphore, #tpu.memory_space<semaphore_mem>>) src(%214 : memref<1x32xf32, #tpu.memory_space<any>>) dst(%215 : memref<1x32xf32, #tpu.memory_space<vmem>>)
      %c8_i32_98 = arith.constant 8 : i32
      %218 = arith.addi %c8_i32_98, %192 : i32
      %c0_i32_99 = arith.constant 0 : i32
      %c0_i32_100 = arith.constant 0 : i32
      %c0_i32_101 = arith.constant 0 : i32
      %219 = tpu.memref_slice %arg4[%c0_i32_100, %c0_i32_101] : memref<64x32xf32, #tpu.memory_space<any>> -> memref<1x32xf32, #tpu.memory_space<any>>
      %c0_i32_102 = arith.constant 0 : i32
      %220 = tpu.memref_slice %arg7[%218, %c0_i32_102] : memref<72x32xf32, #tpu.memory_space<vmem>> -> memref<1x32xf32, #tpu.memory_space<vmem>>
      %221 = tpu.memref_slice %arg8[%c0_i32_99] : memref<1x!tpu.dma_semaphore, #tpu.memory_space<semaphore_mem>> -> memref<1x!tpu.dma_semaphore, #tpu.memory_space<semaphore_mem>>
      %222 = tpu.memref_squeeze %221 : memref<1x!tpu.dma_semaphore, #tpu.memory_space<semaphore_mem>> -> memref<!tpu.dma_semaphore, #tpu.memory_space<semaphore_mem>>
      tpu.wait_dma2 semaphore(%222 : memref<!tpu.dma_semaphore, #tpu.memory_space<semaphore_mem>>) src(%219 : memref<1x32xf32, #tpu.memory_space<any>>) dst(%220 : memref<1x32xf32, #tpu.memory_space<vmem>>)
      %c16_i32_103 = arith.constant 16 : i32
      %223 = arith.addi %c16_i32_103, %192 : i32
      %c0_i32_104 = arith.constant 0 : i32
      %c0_i32_105 = arith.constant 0 : i32
      %c0_i32_106 = arith.constant 0 : i32
      %224 = tpu.memref_slice %arg4[%c0_i32_105, %c0_i32_106] : memref<64x32xf32, #tpu.memory_space<any>> -> memref<1x32xf32, #tpu.memory_space<any>>
      %c0_i32_107 = arith.constant 0 : i32
      %225 = tpu.memref_slice %arg7[%223, %c0_i32_107] : memref<72x32xf32, #tpu.memory_space<vmem>> -> memref<1x32xf32, #tpu.memory_space<vmem>>
      %226 = tpu.memref_slice %arg8[%c0_i32_104] : memref<1x!tpu.dma_semaphore, #tpu.memory_space<semaphore_mem>> -> memref<1x!tpu.dma_semaphore, #tpu.memory_space<semaphore_mem>>
      %227 = tpu.memref_squeeze %226 : memref<1x!tpu.dma_semaphore, #tpu.memory_space<semaphore_mem>> -> memref<!tpu.dma_semaphore, #tpu.memory_space<semaphore_mem>>
      tpu.wait_dma2 semaphore(%227 : memref<!tpu.dma_semaphore, #tpu.memory_space<semaphore_mem>>) src(%224 : memref<1x32xf32, #tpu.memory_space<any>>) dst(%225 : memref<1x32xf32, #tpu.memory_space<vmem>>)
      %c24_i32_108 = arith.constant 24 : i32
      %228 = arith.addi %c24_i32_108, %192 : i32
      %c0_i32_109 = arith.constant 0 : i32
      %c0_i32_110 = arith.constant 0 : i32
      %c0_i32_111 = arith.constant 0 : i32
      %229 = tpu.memref_slice %arg4[%c0_i32_110, %c0_i32_111] : memref<64x32xf32, #tpu.memory_space<any>> -> memref<1x32xf32, #tpu.memory_space<any>>
      %c0_i32_112 = arith.constant 0 : i32
      %230 = tpu.memref_slice %arg7[%228, %c0_i32_112] : memref<72x32xf32, #tpu.memory_space<vmem>> -> memref<1x32xf32, #tpu.memory_space<vmem>>
      %231 = tpu.memref_slice %arg8[%c0_i32_109] : memref<1x!tpu.dma_semaphore, #tpu.memory_space<semaphore_mem>> -> memref<1x!tpu.dma_semaphore, #tpu.memory_space<semaphore_mem>>
      %232 = tpu.memref_squeeze %231 : memref<1x!tpu.dma_semaphore, #tpu.memory_space<semaphore_mem>> -> memref<!tpu.dma_semaphore, #tpu.memory_space<semaphore_mem>>
      tpu.wait_dma2 semaphore(%232 : memref<!tpu.dma_semaphore, #tpu.memory_space<semaphore_mem>>) src(%229 : memref<1x32xf32, #tpu.memory_space<any>>) dst(%230 : memref<1x32xf32, #tpu.memory_space<vmem>>)
      %c32_i32 = arith.constant 32 : i32
      %233 = arith.addi %c32_i32, %192 : i32
      %c0_i32_113 = arith.constant 0 : i32
      %c0_i32_114 = arith.constant 0 : i32
      %c0_i32_115 = arith.constant 0 : i32
      %234 = tpu.memref_slice %arg4[%c0_i32_114, %c0_i32_115] : memref<64x32xf32, #tpu.memory_space<any>> -> memref<1x32xf32, #tpu.memory_space<any>>
      %c0_i32_116 = arith.constant 0 : i32
      %235 = tpu.memref_slice %arg7[%233, %c0_i32_116] : memref<72x32xf32, #tpu.memory_space<vmem>> -> memref<1x32xf32, #tpu.memory_space<vmem>>
      %236 = tpu.memref_slice %arg8[%c0_i32_113] : memref<1x!tpu.dma_semaphore, #tpu.memory_space<semaphore_mem>> -> memref<1x!tpu.dma_semaphore, #tpu.memory_space<semaphore_mem>>
      %237 = tpu.memref_squeeze %236 : memref<1x!tpu.dma_semaphore, #tpu.memory_space<semaphore_mem>> -> memref<!tpu.dma_semaphore, #tpu.memory_space<semaphore_mem>>
      tpu.wait_dma2 semaphore(%237 : memref<!tpu.dma_semaphore, #tpu.memory_space<semaphore_mem>>) src(%234 : memref<1x32xf32, #tpu.memory_space<any>>) dst(%235 : memref<1x32xf32, #tpu.memory_space<vmem>>)
      %c40_i32 = arith.constant 40 : i32
      %238 = arith.addi %c40_i32, %192 : i32
      %c0_i32_117 = arith.constant 0 : i32
      %c0_i32_118 = arith.constant 0 : i32
      %c0_i32_119 = arith.constant 0 : i32
      %239 = tpu.memref_slice %arg4[%c0_i32_118, %c0_i32_119] : memref<64x32xf32, #tpu.memory_space<any>> -> memref<1x32xf32, #tpu.memory_space<any>>
      %c0_i32_120 = arith.constant 0 : i32
      %240 = tpu.memref_slice %arg7[%238, %c0_i32_120] : memref<72x32xf32, #tpu.memory_space<vmem>> -> memref<1x32xf32, #tpu.memory_space<vmem>>
      %241 = tpu.memref_slice %arg8[%c0_i32_117] : memref<1x!tpu.dma_semaphore, #tpu.memory_space<semaphore_mem>> -> memref<1x!tpu.dma_semaphore, #tpu.memory_space<semaphore_mem>>
      %242 = tpu.memref_squeeze %241 : memref<1x!tpu.dma_semaphore, #tpu.memory_space<semaphore_mem>> -> memref<!tpu.dma_semaphore, #tpu.memory_space<semaphore_mem>>
      tpu.wait_dma2 semaphore(%242 : memref<!tpu.dma_semaphore, #tpu.memory_space<semaphore_mem>>) src(%239 : memref<1x32xf32, #tpu.memory_space<any>>) dst(%240 : memref<1x32xf32, #tpu.memory_space<vmem>>)
      %c48_i32 = arith.constant 48 : i32
      %243 = arith.addi %c48_i32, %192 : i32
      %c0_i32_121 = arith.constant 0 : i32
      %c0_i32_122 = arith.constant 0 : i32
      %c0_i32_123 = arith.constant 0 : i32
      %244 = tpu.memref_slice %arg4[%c0_i32_122, %c0_i32_123] : memref<64x32xf32, #tpu.memory_space<any>> -> memref<1x32xf32, #tpu.memory_space<any>>
      %c0_i32_124 = arith.constant 0 : i32
      %245 = tpu.memref_slice %arg7[%243, %c0_i32_124] : memref<72x32xf32, #tpu.memory_space<vmem>> -> memref<1x32xf32, #tpu.memory_space<vmem>>
      %246 = tpu.memref_slice %arg8[%c0_i32_121] : memref<1x!tpu.dma_semaphore, #tpu.memory_space<semaphore_mem>> -> memref<1x!tpu.dma_semaphore, #tpu.memory_space<semaphore_mem>>
      %247 = tpu.memref_squeeze %246 : memref<1x!tpu.dma_semaphore, #tpu.memory_space<semaphore_mem>> -> memref<!tpu.dma_semaphore, #tpu.memory_space<semaphore_mem>>
      tpu.wait_dma2 semaphore(%247 : memref<!tpu.dma_semaphore, #tpu.memory_space<semaphore_mem>>) src(%244 : memref<1x32xf32, #tpu.memory_space<any>>) dst(%245 : memref<1x32xf32, #tpu.memory_space<vmem>>)
      %c56_i32 = arith.constant 56 : i32
      %248 = arith.addi %c56_i32, %192 : i32
      %c0_i32_125 = arith.constant 0 : i32
      %c0_i32_126 = arith.constant 0 : i32
      %c0_i32_127 = arith.constant 0 : i32
      %249 = tpu.memref_slice %arg4[%c0_i32_126, %c0_i32_127] : memref<64x32xf32, #tpu.memory_space<any>> -> memref<1x32xf32, #tpu.memory_space<any>>
      %c0_i32_128 = arith.constant 0 : i32
      %250 = tpu.memref_slice %arg7[%248, %c0_i32_128] : memref<72x32xf32, #tpu.memory_space<vmem>> -> memref<1x32xf32, #tpu.memory_space<vmem>>
      %251 = tpu.memref_slice %arg8[%c0_i32_125] : memref<1x!tpu.dma_semaphore, #tpu.memory_space<semaphore_mem>> -> memref<1x!tpu.dma_semaphore, #tpu.memory_space<semaphore_mem>>
      %252 = tpu.memref_squeeze %251 : memref<1x!tpu.dma_semaphore, #tpu.memory_space<semaphore_mem>> -> memref<!tpu.dma_semaphore, #tpu.memory_space<semaphore_mem>>
      tpu.wait_dma2 semaphore(%252 : memref<!tpu.dma_semaphore, #tpu.memory_space<semaphore_mem>>) src(%249 : memref<1x32xf32, #tpu.memory_space<any>>) dst(%250 : memref<1x32xf32, #tpu.memory_space<vmem>>)
      %c64_i32 = arith.constant 64 : i32
      %253 = arith.addi %c64_i32, %192 : i32
      %c0_i32_129 = arith.constant 0 : i32
      %c0_i32_130 = arith.constant 0 : i32
      %c0_i32_131 = arith.constant 0 : i32
      %254 = tpu.memref_slice %arg4[%c0_i32_130, %c0_i32_131] : memref<64x32xf32, #tpu.memory_space<any>> -> memref<1x32xf32, #tpu.memory_space<any>>
      %c0_i32_132 = arith.constant 0 : i32
      %255 = tpu.memref_slice %arg7[%253, %c0_i32_132] : memref<72x32xf32, #tpu.memory_space<vmem>> -> memref<1x32xf32, #tpu.memory_space<vmem>>
      %256 = tpu.memref_slice %arg8[%c0_i32_129] : memref<1x!tpu.dma_semaphore, #tpu.memory_space<semaphore_mem>> -> memref<1x!tpu.dma_semaphore, #tpu.memory_space<semaphore_mem>>
      %257 = tpu.memref_squeeze %256 : memref<1x!tpu.dma_semaphore, #tpu.memory_space<semaphore_mem>> -> memref<!tpu.dma_semaphore, #tpu.memory_space<semaphore_mem>>
      tpu.wait_dma2 semaphore(%257 : memref<!tpu.dma_semaphore, #tpu.memory_space<semaphore_mem>>) src(%254 : memref<1x32xf32, #tpu.memory_space<any>>) dst(%255 : memref<1x32xf32, #tpu.memory_space<vmem>>)
    }
    %c8_i32_5 = arith.constant 8 : i32
    %c0 = arith.constant 0 : index
    %c0_6 = arith.constant 0 : index
    %3 = vector.load %arg6[%c0, %c0_6] : memref<32x32xf32, #tpu.memory_space<vmem>>, vector<8x32xf32>
    %c8 = arith.constant 8 : index
    %c0_7 = arith.constant 0 : index
    %4 = vector.load %arg6[%c8, %c0_7] : memref<32x32xf32, #tpu.memory_space<vmem>>, vector<8x32xf32>
    %5 = arith.addf %3, %4 : vector<8x32xf32>
    %c16 = arith.constant 16 : index
    %c0_8 = arith.constant 0 : index
    %6 = vector.load %arg6[%c16, %c0_8] : memref<32x32xf32, #tpu.memory_space<vmem>>, vector<8x32xf32>
    %7 = arith.addf %5, %6 : vector<8x32xf32>
    %c24 = arith.constant 24 : index
    %c0_9 = arith.constant 0 : index
    %8 = vector.load %arg6[%c24, %c0_9] : memref<32x32xf32, #tpu.memory_space<vmem>>, vector<8x32xf32>
    %9 = arith.addf %7, %8 : vector<8x32xf32>
    %10 = tpu.iota {dimensions = array<i32: 0>} : vector<8x1xi32>
    %11 = vector.broadcast %0 : i32 to vector<8x1xi32>
    %12 = arith.addi %11, %10 : vector<8x1xi32>
    %c12_i32 = arith.constant 12 : i32
    %13 = vector.broadcast %c12_i32 : i32 to vector<8x1xi32>
    %14 = arith.cmpi slt, %12, %13 : vector<8x1xi32>
    %c0_10 = arith.constant 0 : index
    %c0_11 = arith.constant 0 : index
    %15 = vector.load %arg7[%c0_10, %c0_11] : memref<72x32xf32, #tpu.memory_space<vmem>>, vector<8x32xf32>
    %16 = arith.mulf %15, %9 : vector<8x32xf32>
    %cst = arith.constant dense<0.000000e+00> : vector<8xf32>
    %17 = vector.multi_reduction <add>, %16, %cst [1] : vector<8x32xf32> to vector<8xf32>
    %18 = vector.shape_cast %17 : vector<8xf32> to vector<8x1xf32>
    %cst_12 = arith.constant 0.000000e+00 : f32
    %19 = vector.broadcast %cst_12 : f32 to vector<8x1xf32>
    %20 = arith.subf %19, %18 : vector<8x1xf32>
    %cst_13 = arith.constant 0.000000e+00 : f32
    %21 = vector.broadcast %cst_13 : f32 to vector<8x1xf32>
    %22 = arith.maximumf %20, %21 : vector<8x1xf32>
    %23 = math.absf %20 : vector<8x1xf32>
    %cst_14 = arith.constant 0.000000e+00 : f32
    %24 = vector.broadcast %cst_14 : f32 to vector<8x1xf32>
    %25 = arith.subf %24, %23 : vector<8x1xf32>
    %26 = math.exp %25 : vector<8x1xf32>
    %27 = math.log1p %26 : vector<8x1xf32>
    %28 = arith.addf %22, %27 : vector<8x1xf32>
    %cst_15 = arith.constant 0.000000e+00 : f32
    %29 = vector.broadcast %cst_15 : f32 to vector<8x1xf32>
    %30 = arith.select %14, %28, %29 : vector<8x1xi1>, vector<8x1xf32>
    %31 = vector.shape_cast %30 : vector<8x1xf32> to vector<1x8x1xf32>
    %cst_16 = arith.constant dense<0.000000e+00> : vector<1xf32>
    %32 = vector.multi_reduction <add>, %31, %cst_16 [1, 2] : vector<1x8x1xf32> to vector<1xf32>
    %33 = vector.shape_cast %32 : vector<1xf32> to vector<1x1x1xf32>
    %34 = vector.extract %33[0, 0, 0] : f32 from vector<1x1x1xf32>
    %cst_17 = arith.constant 0.000000e+00 : f32
    %35 = arith.addf %cst_17, %34 : f32
    %c8_18 = arith.constant 8 : index
    %c0_19 = arith.constant 0 : index
    %36 = vector.load %arg7[%c8_18, %c0_19] : memref<72x32xf32, #tpu.memory_space<vmem>>, vector<8x32xf32>
    %37 = arith.mulf %36, %9 : vector<8x32xf32>
    %cst_20 = arith.constant dense<0.000000e+00> : vector<8xf32>
    %38 = vector.multi_reduction <add>, %37, %cst_20 [1] : vector<8x32xf32> to vector<8xf32>
    %39 = vector.shape_cast %38 : vector<8xf32> to vector<8x1xf32>
    %cst_21 = arith.constant 0.000000e+00 : f32
    %40 = vector.broadcast %cst_21 : f32 to vector<8x1xf32>
    %41 = arith.maximumf %39, %40 : vector<8x1xf32>
    %42 = math.absf %39 : vector<8x1xf32>
    %cst_22 = arith.constant 0.000000e+00 : f32
    %43 = vector.broadcast %cst_22 : f32 to vector<8x1xf32>
    %44 = arith.subf %43, %42 : vector<8x1xf32>
    %45 = math.exp %44 : vector<8x1xf32>
    %46 = math.log1p %45 : vector<8x1xf32>
    %47 = arith.addf %41, %46 : vector<8x1xf32>
    %cst_23 = arith.constant 0.000000e+00 : f32
    %48 = vector.broadcast %cst_23 : f32 to vector<8x1xf32>
    %49 = arith.select %14, %47, %48 : vector<8x1xi1>, vector<8x1xf32>
    %50 = vector.shape_cast %49 : vector<8x1xf32> to vector<1x8x1xf32>
    %cst_24 = arith.constant dense<0.000000e+00> : vector<1xf32>
    %51 = vector.multi_reduction <add>, %50, %cst_24 [1, 2] : vector<1x8x1xf32> to vector<1xf32>
    %52 = vector.shape_cast %51 : vector<1xf32> to vector<1x1x1xf32>
    %53 = vector.extract %52[0, 0, 0] : f32 from vector<1x1x1xf32>
    %54 = arith.addf %35, %53 : f32
    %c16_25 = arith.constant 16 : index
    %c0_26 = arith.constant 0 : index
    %55 = vector.load %arg7[%c16_25, %c0_26] : memref<72x32xf32, #tpu.memory_space<vmem>>, vector<8x32xf32>
    %56 = arith.mulf %55, %9 : vector<8x32xf32>
    %cst_27 = arith.constant dense<0.000000e+00> : vector<8xf32>
    %57 = vector.multi_reduction <add>, %56, %cst_27 [1] : vector<8x32xf32> to vector<8xf32>
    %58 = vector.shape_cast %57 : vector<8xf32> to vector<8x1xf32>
    %cst_28 = arith.constant 0.000000e+00 : f32
    %59 = vector.broadcast %cst_28 : f32 to vector<8x1xf32>
    %60 = arith.maximumf %58, %59 : vector<8x1xf32>
    %61 = math.absf %58 : vector<8x1xf32>
    %cst_29 = arith.constant 0.000000e+00 : f32
    %62 = vector.broadcast %cst_29 : f32 to vector<8x1xf32>
    %63 = arith.subf %62, %61 : vector<8x1xf32>
    %64 = math.exp %63 : vector<8x1xf32>
    %65 = math.log1p %64 : vector<8x1xf32>
    %66 = arith.addf %60, %65 : vector<8x1xf32>
    %cst_30 = arith.constant 0.000000e+00 : f32
    %67 = vector.broadcast %cst_30 : f32 to vector<8x1xf32>
    %68 = arith.select %14, %66, %67 : vector<8x1xi1>, vector<8x1xf32>
    %69 = vector.shape_cast %68 : vector<8x1xf32> to vector<1x8x1xf32>
    %cst_31 = arith.constant dense<0.000000e+00> : vector<1xf32>
    %70 = vector.multi_reduction <add>, %69, %cst_31 [1, 2] : vector<1x8x1xf32> to vector<1xf32>
    %71 = vector.shape_cast %70 : vector<1xf32> to vector<1x1x1xf32>
    %72 = vector.extract %71[0, 0, 0] : f32 from vector<1x1x1xf32>
    %73 = arith.addf %54, %72 : f32
    %c24_32 = arith.constant 24 : index
    %c0_33 = arith.constant 0 : index
    %74 = vector.load %arg7[%c24_32, %c0_33] : memref<72x32xf32, #tpu.memory_space<vmem>>, vector<8x32xf32>
    %75 = arith.mulf %74, %9 : vector<8x32xf32>
    %cst_34 = arith.constant dense<0.000000e+00> : vector<8xf32>
    %76 = vector.multi_reduction <add>, %75, %cst_34 [1] : vector<8x32xf32> to vector<8xf32>
    %77 = vector.shape_cast %76 : vector<8xf32> to vector<8x1xf32>
    %cst_35 = arith.constant 0.000000e+00 : f32
    %78 = vector.broadcast %cst_35 : f32 to vector<8x1xf32>
    %79 = arith.maximumf %77, %78 : vector<8x1xf32>
    %80 = math.absf %77 : vector<8x1xf32>
    %cst_36 = arith.constant 0.000000e+00 : f32
    %81 = vector.broadcast %cst_36 : f32 to vector<8x1xf32>
    %82 = arith.subf %81, %80 : vector<8x1xf32>
    %83 = math.exp %82 : vector<8x1xf32>
    %84 = math.log1p %83 : vector<8x1xf32>
    %85 = arith.addf %79, %84 : vector<8x1xf32>
    %cst_37 = arith.constant 0.000000e+00 : f32
    %86 = vector.broadcast %cst_37 : f32 to vector<8x1xf32>
    %87 = arith.select %14, %85, %86 : vector<8x1xi1>, vector<8x1xf32>
    %88 = vector.shape_cast %87 : vector<8x1xf32> to vector<1x8x1xf32>
    %cst_38 = arith.constant dense<0.000000e+00> : vector<1xf32>
    %89 = vector.multi_reduction <add>, %88, %cst_38 [1, 2] : vector<1x8x1xf32> to vector<1xf32>
    %90 = vector.shape_cast %89 : vector<1xf32> to vector<1x1x1xf32>
    %91 = vector.extract %90[0, 0, 0] : f32 from vector<1x1x1xf32>
    %92 = arith.addf %73, %91 : f32
    %c32 = arith.constant 32 : index
    %c0_39 = arith.constant 0 : index
    %93 = vector.load %arg7[%c32, %c0_39] : memref<72x32xf32, #tpu.memory_space<vmem>>, vector<8x32xf32>
    %94 = arith.mulf %93, %9 : vector<8x32xf32>
    %cst_40 = arith.constant dense<0.000000e+00> : vector<8xf32>
    %95 = vector.multi_reduction <add>, %94, %cst_40 [1] : vector<8x32xf32> to vector<8xf32>
    %96 = vector.shape_cast %95 : vector<8xf32> to vector<8x1xf32>
    %cst_41 = arith.constant 0.000000e+00 : f32
    %97 = vector.broadcast %cst_41 : f32 to vector<8x1xf32>
    %98 = arith.maximumf %96, %97 : vector<8x1xf32>
    %99 = math.absf %96 : vector<8x1xf32>
    %cst_42 = arith.constant 0.000000e+00 : f32
    %100 = vector.broadcast %cst_42 : f32 to vector<8x1xf32>
    %101 = arith.subf %100, %99 : vector<8x1xf32>
    %102 = math.exp %101 : vector<8x1xf32>
    %103 = math.log1p %102 : vector<8x1xf32>
    %104 = arith.addf %98, %103 : vector<8x1xf32>
    %cst_43 = arith.constant 0.000000e+00 : f32
    %105 = vector.broadcast %cst_43 : f32 to vector<8x1xf32>
    %106 = arith.select %14, %104, %105 : vector<8x1xi1>, vector<8x1xf32>
    %107 = vector.shape_cast %106 : vector<8x1xf32> to vector<1x8x1xf32>
    %cst_44 = arith.constant dense<0.000000e+00> : vector<1xf32>
    %108 = vector.multi_reduction <add>, %107, %cst_44 [1, 2] : vector<1x8x1xf32> to vector<1xf32>
    %109 = vector.shape_cast %108 : vector<1xf32> to vector<1x1x1xf32>
    %110 = vector.extract %109[0, 0, 0] : f32 from vector<1x1x1xf32>
    %111 = arith.addf %92, %110 : f32
    %c40 = arith.constant 40 : index
    %c0_45 = arith.constant 0 : index
    %112 = vector.load %arg7[%c40, %c0_45] : memref<72x32xf32, #tpu.memory_space<vmem>>, vector<8x32xf32>
    %113 = arith.mulf %112, %9 : vector<8x32xf32>
    %cst_46 = arith.constant dense<0.000000e+00> : vector<8xf32>
    %114 = vector.multi_reduction <add>, %113, %cst_46 [1] : vector<8x32xf32> to vector<8xf32>
    %115 = vector.shape_cast %114 : vector<8xf32> to vector<8x1xf32>
    %cst_47 = arith.constant 0.000000e+00 : f32
    %116 = vector.broadcast %cst_47 : f32 to vector<8x1xf32>
    %117 = arith.maximumf %115, %116 : vector<8x1xf32>
    %118 = math.absf %115 : vector<8x1xf32>
    %cst_48 = arith.constant 0.000000e+00 : f32
    %119 = vector.broadcast %cst_48 : f32 to vector<8x1xf32>
    %120 = arith.subf %119, %118 : vector<8x1xf32>
    %121 = math.exp %120 : vector<8x1xf32>
    %122 = math.log1p %121 : vector<8x1xf32>
    %123 = arith.addf %117, %122 : vector<8x1xf32>
    %cst_49 = arith.constant 0.000000e+00 : f32
    %124 = vector.broadcast %cst_49 : f32 to vector<8x1xf32>
    %125 = arith.select %14, %123, %124 : vector<8x1xi1>, vector<8x1xf32>
    %126 = vector.shape_cast %125 : vector<8x1xf32> to vector<1x8x1xf32>
    %cst_50 = arith.constant dense<0.000000e+00> : vector<1xf32>
    %127 = vector.multi_reduction <add>, %126, %cst_50 [1, 2] : vector<1x8x1xf32> to vector<1xf32>
    %128 = vector.shape_cast %127 : vector<1xf32> to vector<1x1x1xf32>
    %129 = vector.extract %128[0, 0, 0] : f32 from vector<1x1x1xf32>
    %130 = arith.addf %111, %129 : f32
    %c48 = arith.constant 48 : index
    %c0_51 = arith.constant 0 : index
    %131 = vector.load %arg7[%c48, %c0_51] : memref<72x32xf32, #tpu.memory_space<vmem>>, vector<8x32xf32>
    %132 = arith.mulf %131, %9 : vector<8x32xf32>
    %cst_52 = arith.constant dense<0.000000e+00> : vector<8xf32>
    %133 = vector.multi_reduction <add>, %132, %cst_52 [1] : vector<8x32xf32> to vector<8xf32>
    %134 = vector.shape_cast %133 : vector<8xf32> to vector<8x1xf32>
    %cst_53 = arith.constant 0.000000e+00 : f32
    %135 = vector.broadcast %cst_53 : f32 to vector<8x1xf32>
    %136 = arith.maximumf %134, %135 : vector<8x1xf32>
    %137 = math.absf %134 : vector<8x1xf32>
    %cst_54 = arith.constant 0.000000e+00 : f32
    %138 = vector.broadcast %cst_54 : f32 to vector<8x1xf32>
    %139 = arith.subf %138, %137 : vector<8x1xf32>
    %140 = math.exp %139 : vector<8x1xf32>
    %141 = math.log1p %140 : vector<8x1xf32>
    %142 = arith.addf %136, %141 : vector<8x1xf32>
    %cst_55 = arith.constant 0.000000e+00 : f32
    %143 = vector.broadcast %cst_55 : f32 to vector<8x1xf32>
    %144 = arith.select %14, %142, %143 : vector<8x1xi1>, vector<8x1xf32>
    %145 = vector.shape_cast %144 : vector<8x1xf32> to vector<1x8x1xf32>
    %cst_56 = arith.constant dense<0.000000e+00> : vector<1xf32>
    %146 = vector.multi_reduction <add>, %145, %cst_56 [1, 2] : vector<1x8x1xf32> to vector<1xf32>
    %147 = vector.shape_cast %146 : vector<1xf32> to vector<1x1x1xf32>
    %148 = vector.extract %147[0, 0, 0] : f32 from vector<1x1x1xf32>
    %149 = arith.addf %130, %148 : f32
    %c56 = arith.constant 56 : index
    %c0_57 = arith.constant 0 : index
    %150 = vector.load %arg7[%c56, %c0_57] : memref<72x32xf32, #tpu.memory_space<vmem>>, vector<8x32xf32>
    %151 = arith.mulf %150, %9 : vector<8x32xf32>
    %cst_58 = arith.constant dense<0.000000e+00> : vector<8xf32>
    %152 = vector.multi_reduction <add>, %151, %cst_58 [1] : vector<8x32xf32> to vector<8xf32>
    %153 = vector.shape_cast %152 : vector<8xf32> to vector<8x1xf32>
    %cst_59 = arith.constant 0.000000e+00 : f32
    %154 = vector.broadcast %cst_59 : f32 to vector<8x1xf32>
    %155 = arith.maximumf %153, %154 : vector<8x1xf32>
    %156 = math.absf %153 : vector<8x1xf32>
    %cst_60 = arith.constant 0.000000e+00 : f32
    %157 = vector.broadcast %cst_60 : f32 to vector<8x1xf32>
    %158 = arith.subf %157, %156 : vector<8x1xf32>
    %159 = math.exp %158 : vector<8x1xf32>
    %160 = math.log1p %159 : vector<8x1xf32>
    %161 = arith.addf %155, %160 : vector<8x1xf32>
    %cst_61 = arith.constant 0.000000e+00 : f32
    %162 = vector.broadcast %cst_61 : f32 to vector<8x1xf32>
    %163 = arith.select %14, %161, %162 : vector<8x1xi1>, vector<8x1xf32>
    %164 = vector.shape_cast %163 : vector<8x1xf32> to vector<1x8x1xf32>
    %cst_62 = arith.constant dense<0.000000e+00> : vector<1xf32>
    %165 = vector.multi_reduction <add>, %164, %cst_62 [1, 2] : vector<1x8x1xf32> to vector<1xf32>
    %166 = vector.shape_cast %165 : vector<1xf32> to vector<1x1x1xf32>
    %167 = vector.extract %166[0, 0, 0] : f32 from vector<1x1x1xf32>
    %168 = arith.addf %149, %167 : f32
    %c64 = arith.constant 64 : index
    %c0_63 = arith.constant 0 : index
    %169 = vector.load %arg7[%c64, %c0_63] : memref<72x32xf32, #tpu.memory_space<vmem>>, vector<8x32xf32>
    %170 = arith.mulf %169, %9 : vector<8x32xf32>
    %cst_64 = arith.constant dense<0.000000e+00> : vector<8xf32>
    %171 = vector.multi_reduction <add>, %170, %cst_64 [1] : vector<8x32xf32> to vector<8xf32>
    %172 = vector.shape_cast %171 : vector<8xf32> to vector<8x1xf32>
    %cst_65 = arith.constant 0.000000e+00 : f32
    %173 = vector.broadcast %cst_65 : f32 to vector<8x1xf32>
    %174 = arith.maximumf %172, %173 : vector<8x1xf32>
    %175 = math.absf %172 : vector<8x1xf32>
    %cst_66 = arith.constant 0.000000e+00 : f32
    %176 = vector.broadcast %cst_66 : f32 to vector<8x1xf32>
    %177 = arith.subf %176, %175 : vector<8x1xf32>
    %178 = math.exp %177 : vector<8x1xf32>
    %179 = math.log1p %178 : vector<8x1xf32>
    %180 = arith.addf %174, %179 : vector<8x1xf32>
    %cst_67 = arith.constant 0.000000e+00 : f32
    %181 = vector.broadcast %cst_67 : f32 to vector<8x1xf32>
    %182 = arith.select %14, %180, %181 : vector<8x1xi1>, vector<8x1xf32>
    %183 = vector.shape_cast %182 : vector<8x1xf32> to vector<1x8x1xf32>
    %cst_68 = arith.constant dense<0.000000e+00> : vector<1xf32>
    %184 = vector.multi_reduction <add>, %183, %cst_68 [1, 2] : vector<1x8x1xf32> to vector<1xf32>
    %185 = vector.shape_cast %184 : vector<1xf32> to vector<1x1x1xf32>
    %186 = vector.extract %185[0, 0, 0] : f32 from vector<1x1x1xf32>
    %187 = arith.addf %168, %186 : f32
    %cst_69 = arith.constant 0.000000e+00 : f32
    %188 = arith.subf %cst_69, %187 : f32
    %189 = vector.broadcast %188 : f32 to vector<1x8x128xf32>
    %c0_70 = arith.constant 0 : index
    %c0_71 = arith.constant 0 : index
    %c0_72 = arith.constant 0 : index
    %190 = vector.load %arg5[%c0_70, %c0_71, %c0_72] : memref<1x8x128xf32, #tpu.memory_space<vmem>>, vector<1x8x128xf32>
    tpu.vector_store %arg5[%c0_70, %c0_71, %c0_72], %189 {strides = array<i32>} : memref<1x8x128xf32, #tpu.memory_space<vmem>>, vector<1x8x128xf32>,
    return
  }
  func.func @transform_2(%arg0: i32, %arg1: memref<64xi32, #tpu.memory_space<smem>>, %arg2: memref<144xi32, #tpu.memory_space<smem>>) -> (i32, i32, i32) {
    %c0_i32 = arith.constant 0 : i32
    %c0_i32_0 = arith.constant 0 : i32
    %c0_i32_1 = arith.constant 0 : i32
    return %arg0, %c0_i32, %c0_i32_0 : i32, i32, i32
  }
}

</mosaic_0001>

<llo_original>
// kernel: tpu_custom_call.1
$region0: #{tpu_custom_call.1}
  #allocation0 [shape = 'u32[]', space=smem, size = 0x4, offset = 0x4, fixed_abs, tag = 'smem constant byte address 0x4 - core index']
  #allocation1 [shape = 'u32[144,128]{1,0:T(1,128)}', space=vmem, size = 0x12000, scoped, tag = 'internal scratch']
  #allocation2 [shape = 'f32[32,32]{1,0:T(8,128)}', space=vmem, size = 0x4000, scoped, tag = 'scratch operand']
  #allocation3 [shape = 'f32[72,32]{1,0:T(8,128)}', space=vmem, size = 0x9000, scoped, tag = 'scratch operand']
  #allocation4 [shape = 's32[1]{0}', space=sflag, size = 0x4, scoped, tag = 'scratch operand']
  #allocation5 [shape = 's32[1]{0}', space=sflag, size = 0x4, scoped, tag = 'scoped memory for tpu_custom_call.1']
  #allocation6 [shape = 'u8[512]{0}', space=smem, size = 0x200, scoped, tag = 'prefetched SMEM operand 0']
  #allocation7 [shape = 'u8[1024]{0}', space=smem, size = 0x400, scoped, tag = 'prefetched SMEM operand 1']
  #allocation10 [shape = 's32[]', space=sflag, size = 0x4, offset = 0, fixed_abs, tag = 'sflag constant byte address 0x0 - dummy sync flag']
  #allocation11 [shape = 's32[]', space=sflag, size = 0x4, offset = 0, fixed_abs, tag = 'sflag constant byte address 0x0 - dummy sync flag']
  #allocation12 [shape = 's32[]', space=sflag, size = 0x4, offset = 0, fixed_abs, tag = 'sflag constant byte address 0x0 - dummy sync flag']
  #allocation13 [shape = 's32[]', space=sflag, size = 0x4, offset = 0, fixed_abs, tag = 'sflag constant byte address 0x0 - dummy sync flag']
  #allocation14 [shape = 's32[]', space=sflag, size = 0x4, offset = 0, fixed_abs, tag = 'sflag constant byte address 0x0 - dummy sync flag']
  #allocation15 [shape = 's32[]', space=sflag, size = 0x4, offset = 0, fixed_abs, tag = 'sflag constant byte address 0x0 - dummy sync flag']
  #allocation16 [shape = 's32[]', space=sflag, size = 0x4, offset = 0, fixed_abs, tag = 'sflag constant byte address 0x0 - dummy sync flag']
  #allocation17 [shape = 's32[]', space=sflag, size = 0x4, offset = 0, fixed_abs, tag = 'sflag constant byte address 0x0 - dummy sync flag']
  #allocation18 [shape = 's32[]', space=sflag, size = 0x4, offset = 0, fixed_abs, tag = 'sflag constant byte address 0x0 - dummy sync flag']
  #allocation19 [shape = 's32[]', space=sflag, size = 0x4, offset = 0, fixed_abs, tag = 'sflag constant byte address 0x0 - dummy sync flag']
  #allocation20 [shape = 's32[]', space=sflag, size = 0x4, offset = 0, fixed_abs, tag = 'sflag constant byte address 0x0 - dummy sync flag']
  #allocation21 [shape = 's32[]', space=sflag, size = 0x4, offset = 0, fixed_abs, tag = 'sflag constant byte address 0x0 - dummy sync flag']
  #allocation22 [shape = 's32[]', space=sflag, size = 0x4, offset = 0, fixed_abs, tag = 'sflag constant byte address 0x0 - dummy sync flag']
  %s0 = inlined_call_operand.vmem [shape: s32[64], index: 0, kind: input, shape index: {}]
  %s1 = inlined_call_operand.vmem [shape: s32[144], index: 1, kind: input, shape index: {}]
  %s2 = inlined_call_operand.vmem [shape: f32[65,32], index: 2, kind: input, shape index: {}]
  %s3 = inlined_call_operand.vmem [shape: f32[64,32], index: 3, kind: input, shape index: {}]
  %s4 = inlined_call_operand.hbm [shape: f32[2,8,128], index: 4, kind: output, shape index: {}]
  %s5 = sld [smem:[#allocation0]]
  $region429: #{tpu_custom_call.1} parent=0
    _
  %s7 = ssub.s32 1, %s5
  %s8 = scalar_select 0, %s7, %s5
  %s9 = sshll.u32 %s0, 4
  %s10 = int_to_ptr.vmem [resolvable:$true] %s9
  %12 = dma.vmem_to_smem %s10, 16, [#allocation6], [#allocation5]
  %s13 = sshll.u32 %s1, 4
  %s14 = int_to_ptr.vmem [resolvable:$true] %s13
  %16 = dma.vmem_to_smem %s14, 32, [#allocation7], [#allocation5]
  %17 = dma.done [#allocation5], 48
  %18 = sfence
  $region1: #{tpu_custom_call.1} parent=0
    #allocation8 [shape = 'u8[8192]{0}', space=vmem, size = 0x2000, scoped, tag = 'output window, operand 0']
    #allocation9 [shape = 's32[2]{0}', space=sflag, size = 0x8, scoped, tag = 'scoped memory for tpu_custom_call.1']
    %19 = vsyncpa [#allocation9], 0
    %s20 = scalar_lea.sflag [#allocation9], 1
    %21 = vsyncpa %s20, 0
    loop: start=0, step=1, limit=3
    $region2: #{tpu_custom_call.1} parent=1 // loop_pre_header
      _
    $region3: #{tpu_custom_call.1} parent=1 // loop_header
      %s23 = sphi 0, %s27
      %p24 = scmp.ge.s32.totalorder %s23, 3
      %s32 = sphi 0, %s34
      %s35 = sphi 0, %s32
      %s45 = sphi 0, %s35
    $region4: #{tpu_custom_call.1} parent=1 // loop_header_branch
      %26 = sbr.rel (%p24) target = $region8
    $region5: #{tpu_custom_call.1} parent=1 // loop_body
      %s28 = ssub.s32 %s23, 1
      %s29 = sadd.s32 %s23, 1
      %s30 = ssub.s32 %s23, %s29
      %p31 = scmp.eq.s32.totalorder %s30, 0
      %s33 = sadd.s32 %s32, 1
      %s34 = scalar_select %p31, %s32, %s33
      %p36 = pneg %p31
      %p37 = scmp.eq.s32.totalorder %s23, 1
      %p38 = por %p36, %p37
      %p39 = scmp.ne.s32.totalorder %s32, %s35
      %p40 = scmp.eq.s32.totalorder %s23, 0
      %p41 = por %p39, %p40
      %p42 = scmp.ne.s32.totalorder %s32, %s35
      %p43 = scmp.eq.s32.totalorder %s28, 1
      %p44 = por %p42, %p43
      %p46 = scmp.ne.s32.totalorder %s35, %s45
      %p47 = scmp.eq.s32.totalorder %s28, 0
      %p48 = por %p46, %p47
      %p49 = scmp.lt.s32.totalorder %s23, 2
      // Predicated region
      $region9: #{tpu_custom_call.1} parent=5 // pred_check
        %p50 = pneg %p49
      $region10: #{tpu_custom_call.1} parent=5 // pred_check_branch
        %52 = sbr.rel (%p50) target = $region12
      $region11: #{tpu_custom_call.1} parent=5 // pred_region
        %p53 = pneg %p41
        %p54 = pneg %p38
        %s55 = sand.u32 %s32, 1
        %s56 = scalar_lea.sflag [#allocation9], %s55
        %s57 = sand.u32 %s32, 1
        %s58 = smul.addr %s57, 8
        %s59 = scalar_lea.vmem [#allocation8], %s58
        %s60 = smul.u32 %s23, 8
        loop: start=0, step=1, limit=8
        $region13: #{tpu_custom_call.1} parent=11 // loop_pre_header
          _
        $region14: #{tpu_custom_call.1} parent=11 // loop_header
          %s62 = sphi 0, %s66
          %p63 = scmp.ge.s32.totalorder %s62, 8
        $region15: #{tpu_custom_call.1} parent=11 // loop_header_branch
          %65 = sbr.rel (%p63) target = $region19
        $region16: #{tpu_custom_call.1} parent=11 // loop_body
          %s67 = sadd.s32 %s60, %s62
          %s68 = smul.u32 %s67, 4
          %s69 = sld [smem:[#allocation6 + %s68]]
          %s70 = scalar_lea.vmem %s2, %s69
          %s71 = scalar_lea.vmem [#allocation2], %s62
          %p73 = scmp.lt.u32.totalorder 1, 8
          %p74 = pneg %p73
          // Predicated region
          $region20: #{tpu_custom_call.1} parent=16 // pred_check
            _
          $region21: #{tpu_custom_call.1} parent=16 // pred_check_branch
            %76 = sbr.rel (%p73) target = $region23
          $region22: #{tpu_custom_call.1} parent=16 // pred_region
            %s91 = sand.u32 1, 7
            %p92 = scmp.eq.s32.totalorder %s91, 0
            %p93 = pneg %p92
            // Predicated region
            $region35: #{tpu_custom_call.1} parent=22 // pred_check
              _
            $region36: #{tpu_custom_call.1} parent=22 // pred_check_branch
              %95 = sbr.rel (%p92) target = $region38
            $region37: #{tpu_custom_call.1} parent=22 // pred_region
              %s96 = sand.u32 1, 7
              %s97 = ssub.s32 1, %s96
              %s98 = scalar_lea.vmem %s70, %s97
              %s99 = ssub.s32 1, %s96
              %s100 = scalar_lea.vmem %s71, %s99 [#allocation2]
              %s101 = sshllo.u32 0, %s96
              loop: start=0, step=1, limit=1
              $region39: #{tpu_custom_call.1} parent=37 // loop_pre_header
                _
              $region40: #{tpu_custom_call.1} parent=37 // loop_header
                %s103 = sphi 0, %s107
                %p104 = scmp.ge.s32.totalorder %s103, 1
                %s108 = sphi %s98, %s98
                %s109 = sphi %s100, %s100
              $region41: #{tpu_custom_call.1} parent=37 // loop_header_branch
                %106 = sbr.rel (%p104) target = $region45
              $region42: #{tpu_custom_call.1} parent=37 // loop_body
                %v110 = vld [vmem:[%s108] sm:%s101]
                %111 = vst [vmem:[%s109] sm:%s101] %v110
              $region43: #{tpu_custom_call.1} parent=37 // loop_footer
                %s107 = sadd.s32 1, %s103
              $region44: #{tpu_custom_call.1} parent=37 // loop_footer_branch
                %102 = sbr.rel target = $region40
              $region45: #{tpu_custom_call.1} parent=37 // loop_exit
                _
            $region38: #{tpu_custom_call.1} parent=22 // pred_fallthru
              _
          $region23: #{tpu_custom_call.1} parent=16 // pred_fallthru
            _
          // Predicated region
          $region24: #{tpu_custom_call.1} parent=16 // pred_check
            %p77 = pneg %p73
          $region25: #{tpu_custom_call.1} parent=16 // pred_check_branch
            %79 = sbr.rel (%p77) target = $region27
          $region26: #{tpu_custom_call.1} parent=16 // pred_region
            %s80 = sshllo.u32 0, 1
            loop: start=0, step=1, limit=1
            $region28: #{tpu_custom_call.1} parent=26 // loop_pre_header
              _
            $region29: #{tpu_custom_call.1} parent=26 // loop_header
              %s82 = sphi 0, %s86
              %p83 = scmp.ge.s32.totalorder %s82, 1
              %s87 = sphi %s70, %s70
              %s88 = sphi %s71, %s71
            $region30: #{tpu_custom_call.1} parent=26 // loop_header_branch
              %85 = sbr.rel (%p83) target = $region34
            $region31: #{tpu_custom_call.1} parent=26 // loop_body
              %v89 = vld [vmem:[%s87] sm:%s80]
              %90 = vst [vmem:[%s88] sm:%s80] %v89
            $region32: #{tpu_custom_call.1} parent=26 // loop_footer
              %s86 = sadd.s32 1, %s82
            $region33: #{tpu_custom_call.1} parent=26 // loop_footer_branch
              %81 = sbr.rel target = $region29
            $region34: #{tpu_custom_call.1} parent=26 // loop_exit
              _
          $region27: #{tpu_custom_call.1} parent=16 // pred_fallthru
            _
          // Predicated region
          $region46: #{tpu_custom_call.1} parent=16 // pred_check
            _
          $region47: #{tpu_custom_call.1} parent=16 // pred_check_branch
            %114 = sbr.rel (0) target = $region49
          $region48: #{tpu_custom_call.1} parent=16 // pred_region
            %115 = vsyncadd [#allocation4], 16
          $region49: #{tpu_custom_call.1} parent=16 // pred_fallthru
            _
          %s116 = sadd.s32 %s68, 1
          %s117 = sld [smem:[#allocation6 + %s116]]
          %s118 = sadd.s32 %s62, 8
          %s119 = scalar_lea.vmem %s2, %s117
          %s120 = scalar_lea.vmem [#allocation2], %s118
          %p122 = scmp.lt.u32.totalorder 1, 8
          %p123 = pneg %p122
          // Predicated region
          $region50: #{tpu_custom_call.1} parent=16 // pred_check
            _
          $region51: #{tpu_custom_call.1} parent=16 // pred_check_branch
            %125 = sbr.rel (%p122) target = $region53
          $region52: #{tpu_custom_call.1} parent=16 // pred_region
            %s140 = sand.u32 1, 7
            %p141 = scmp.eq.s32.totalorder %s140, 0
            %p142 = pneg %p141
            // Predicated region
            $region65: #{tpu_custom_call.1} parent=52 // pred_check
              _
            $region66: #{tpu_custom_call.1} parent=52 // pred_check_branch
              %144 = sbr.rel (%p141) target = $region68
            $region67: #{tpu_custom_call.1} parent=52 // pred_region
              %s145 = sand.u32 1, 7
              %s146 = ssub.s32 1, %s145
              %s147 = scalar_lea.vmem %s119, %s146
              %s148 = ssub.s32 1, %s145
              %s149 = scalar_lea.vmem %s120, %s148 [#allocation2]
              %s150 = sshllo.u32 0, %s145
              loop: start=0, step=1, limit=1
              $region69: #{tpu_custom_call.1} parent=67 // loop_pre_header
                _
              $region70: #{tpu_custom_call.1} parent=67 // loop_header
                %s152 = sphi 0, %s156
                %p153 = scmp.ge.s32.totalorder %s152, 1
                %s157 = sphi %s147, %s147
                %s158 = sphi %s149, %s149
              $region71: #{tpu_custom_call.1} parent=67 // loop_header_branch
                %155 = sbr.rel (%p153) target = $region75
              $region72: #{tpu_custom_call.1} parent=67 // loop_body
                %v159 = vld [vmem:[%s157] sm:%s150]
                %160 = vst [vmem:[%s158] sm:%s150] %v159
              $region73: #{tpu_custom_call.1} parent=67 // loop_footer
                %s156 = sadd.s32 1, %s152
              $region74: #{tpu_custom_call.1} parent=67 // loop_footer_branch
                %151 = sbr.rel target = $region70
              $region75: #{tpu_custom_call.1} parent=67 // loop_exit
                _
            $region68: #{tpu_custom_call.1} parent=52 // pred_fallthru
              _
          $region53: #{tpu_custom_call.1} parent=16 // pred_fallthru
            _
          // Predicated region
          $region54: #{tpu_custom_call.1} parent=16 // pred_check
            %p126 = pneg %p122
          $region55: #{tpu_custom_call.1} parent=16 // pred_check_branch
            %128 = sbr.rel (%p126) target = $region57
          $region56: #{tpu_custom_call.1} parent=16 // pred_region
            %s129 = sshllo.u32 0, 1
            loop: start=0, step=1, limit=1
            $region58: #{tpu_custom_call.1} parent=56 // loop_pre_header
              _
            $region59: #{tpu_custom_call.1} parent=56 // loop_header
              %s131 = sphi 0, %s135
              %p132 = scmp.ge.s32.totalorder %s131, 1
              %s136 = sphi %s119, %s119
              %s137 = sphi %s120, %s120
            $region60: #{tpu_custom_call.1} parent=56 // loop_header_branch
              %134 = sbr.rel (%p132) target = $region64
            $region61: #{tpu_custom_call.1} parent=56 // loop_body
              %v138 = vld [vmem:[%s136] sm:%s129]
              %139 = vst [vmem:[%s137] sm:%s129] %v138
            $region62: #{tpu_custom_call.1} parent=56 // loop_footer
              %s135 = sadd.s32 1, %s131
            $region63: #{tpu_custom_call.1} parent=56 // loop_footer_branch
              %130 = sbr.rel target = $region59
            $region64: #{tpu_custom_call.1} parent=56 // loop_exit
              _
          $region57: #{tpu_custom_call.1} parent=16 // pred_fallthru
            _
          // Predicated region
          $region76: #{tpu_custom_call.1} parent=16 // pred_check
            _
          $region77: #{tpu_custom_call.1} parent=16 // pred_check_branch
            %163 = sbr.rel (0) target = $region79
          $region78: #{tpu_custom_call.1} parent=16 // pred_region
            %164 = vsyncadd [#allocation4], 16
          $region79: #{tpu_custom_call.1} parent=16 // pred_fallthru
            _
          %s165 = sadd.s32 %s68, 2
          %s166 = sld [smem:[#allocation6 + %s165]]
          %s167 = sadd.s32 %s62, 16
          %s168 = scalar_lea.vmem %s2, %s166
          %s169 = scalar_lea.vmem [#allocation2], %s167
          %p171 = scmp.lt.u32.totalorder 1, 8
          %p172 = pneg %p171
          // Predicated region
          $region80: #{tpu_custom_call.1} parent=16 // pred_check
            _
          $region81: #{tpu_custom_call.1} parent=16 // pred_check_branch
            %174 = sbr.rel (%p171) target = $region83
          $region82: #{tpu_custom_call.1} parent=16 // pred_region
            %s189 = sand.u32 1, 7
            %p190 = scmp.eq.s32.totalorder %s189, 0
            %p191 = pneg %p190
            // Predicated region
            $region95: #{tpu_custom_call.1} parent=82 // pred_check
              _
            $region96: #{tpu_custom_call.1} parent=82 // pred_check_branch
              %193 = sbr.rel (%p190) target = $region98
            $region97: #{tpu_custom_call.1} parent=82 // pred_region
              %s194 = sand.u32 1, 7
              %s195 = ssub.s32 1, %s194
              %s196 = scalar_lea.vmem %s168, %s195
              %s197 = ssub.s32 1, %s194
              %s198 = scalar_lea.vmem %s169, %s197 [#allocation2]
              %s199 = sshllo.u32 0, %s194
              loop: start=0, step=1, limit=1
              $region99: #{tpu_custom_call.1} parent=97 // loop_pre_header
                _
              $region100: #{tpu_custom_call.1} parent=97 // loop_header
                %s201 = sphi 0, %s205
                %p202 = scmp.ge.s32.totalorder %s201, 1
                %s206 = sphi %s196, %s196
                %s207 = sphi %s198, %s198
              $region101: #{tpu_custom_call.1} parent=97 // loop_header_branch
                %204 = sbr.rel (%p202) target = $region105
              $region102: #{tpu_custom_call.1} parent=97 // loop_body
                %v208 = vld [vmem:[%s206] sm:%s199]
                %209 = vst [vmem:[%s207] sm:%s199] %v208
              $region103: #{tpu_custom_call.1} parent=97 // loop_footer
                %s205 = sadd.s32 1, %s201
              $region104: #{tpu_custom_call.1} parent=97 // loop_footer_branch
                %200 = sbr.rel target = $region100
              $region105: #{tpu_custom_call.1} parent=97 // loop_exit
                _
            $region98: #{tpu_custom_call.1} parent=82 // pred_fallthru
              _
          $region83: #{tpu_custom_call.1} parent=16 // pred_fallthru
            _
          // Predicated region
          $region84: #{tpu_custom_call.1} parent=16 // pred_check
            %p175 = pneg %p171
          $region85: #{tpu_custom_call.1} parent=16 // pred_check_branch
            %177 = sbr.rel (%p175) target = $region87
          $region86: #{tpu_custom_call.1} parent=16 // pred_region
            %s178 = sshllo.u32 0, 1
            loop: start=0, step=1, limit=1
            $region88: #{tpu_custom_call.1} parent=86 // loop_pre_header
              _
            $region89: #{tpu_custom_call.1} parent=86 // loop_header
              %s180 = sphi 0, %s184
              %p181 = scmp.ge.s32.totalorder %s180, 1
              %s185 = sphi %s168, %s168
              %s186 = sphi %s169, %s169
            $region90: #{tpu_custom_call.1} parent=86 // loop_header_branch
              %183 = sbr.rel (%p181) target = $region94
            $region91: #{tpu_custom_call.1} parent=86 // loop_body
              %v187 = vld [vmem:[%s185] sm:%s178]
              %188 = vst [vmem:[%s186] sm:%s178] %v187
            $region92: #{tpu_custom_call.1} parent=86 // loop_footer
              %s184 = sadd.s32 1, %s180
            $region93: #{tpu_custom_call.1} parent=86 // loop_footer_branch
              %179 = sbr.rel target = $region89
            $region94: #{tpu_custom_call.1} parent=86 // loop_exit
              _
          $region87: #{tpu_custom_call.1} parent=16 // pred_fallthru
            _
          // Predicated region
          $region106: #{tpu_custom_call.1} parent=16 // pred_check
            _
          $region107: #{tpu_custom_call.1} parent=16 // pred_check_branch
            %212 = sbr.rel (0) target = $region109
          $region108: #{tpu_custom_call.1} parent=16 // pred_region
            %213 = vsyncadd [#allocation4], 16
          $region109: #{tpu_custom_call.1} parent=16 // pred_fallthru
            _
          %s214 = sadd.s32 %s68, 3
          %s215 = sld [smem:[#allocation6 + %s214]]
          %s216 = sadd.s32 %s62, 24
          %s217 = scalar_lea.vmem %s2, %s215
          %s218 = scalar_lea.vmem [#allocation2], %s216
          %p220 = scmp.lt.u32.totalorder 1, 8
          %p221 = pneg %p220
          // Predicated region
          $region110: #{tpu_custom_call.1} parent=16 // pred_check
            _
          $region111: #{tpu_custom_call.1} parent=16 // pred_check_branch
            %223 = sbr.rel (%p220) target = $region113
          $region112: #{tpu_custom_call.1} parent=16 // pred_region
            %s238 = sand.u32 1, 7
            %p239 = scmp.eq.s32.totalorder %s238, 0
            %p240 = pneg %p239
            // Predicated region
            $region125: #{tpu_custom_call.1} parent=112 // pred_check
              _
            $region126: #{tpu_custom_call.1} parent=112 // pred_check_branch
              %242 = sbr.rel (%p239) target = $region128
            $region127: #{tpu_custom_call.1} parent=112 // pred_region
              %s243 = sand.u32 1, 7
              %s244 = ssub.s32 1, %s243
              %s245 = scalar_lea.vmem %s217, %s244
              %s246 = ssub.s32 1, %s243
              %s247 = scalar_lea.vmem %s218, %s246 [#allocation2]
              %s248 = sshllo.u32 0, %s243
              loop: start=0, step=1, limit=1
              $region129: #{tpu_custom_call.1} parent=127 // loop_pre_header
                _
              $region130: #{tpu_custom_call.1} parent=127 // loop_header
                %s250 = sphi 0, %s254
                %p251 = scmp.ge.s32.totalorder %s250, 1
                %s255 = sphi %s245, %s245
                %s256 = sphi %s247, %s247
              $region131: #{tpu_custom_call.1} parent=127 // loop_header_branch
                %253 = sbr.rel (%p251) target = $region135
              $region132: #{tpu_custom_call.1} parent=127 // loop_body
                %v257 = vld [vmem:[%s255] sm:%s248]
                %258 = vst [vmem:[%s256] sm:%s248] %v257
              $region133: #{tpu_custom_call.1} parent=127 // loop_footer
                %s254 = sadd.s32 1, %s250
              $region134: #{tpu_custom_call.1} parent=127 // loop_footer_branch
                %249 = sbr.rel target = $region130
              $region135: #{tpu_custom_call.1} parent=127 // loop_exit
                _
            $region128: #{tpu_custom_call.1} parent=112 // pred_fallthru
              _
          $region113: #{tpu_custom_call.1} parent=16 // pred_fallthru
            _
          // Predicated region
          $region114: #{tpu_custom_call.1} parent=16 // pred_check
            %p224 = pneg %p220
          $region115: #{tpu_custom_call.1} parent=16 // pred_check_branch
            %226 = sbr.rel (%p224) target = $region117
          $region116: #{tpu_custom_call.1} parent=16 // pred_region
            %s227 = sshllo.u32 0, 1
            loop: start=0, step=1, limit=1
            $region118: #{tpu_custom_call.1} parent=116 // loop_pre_header
              _
            $region119: #{tpu_custom_call.1} parent=116 // loop_header
              %s229 = sphi 0, %s233
              %p230 = scmp.ge.s32.totalorder %s229, 1
              %s234 = sphi %s217, %s217
              %s235 = sphi %s218, %s218
            $region120: #{tpu_custom_call.1} parent=116 // loop_header_branch
              %232 = sbr.rel (%p230) target = $region124
            $region121: #{tpu_custom_call.1} parent=116 // loop_body
              %v236 = vld [vmem:[%s234] sm:%s227]
              %237 = vst [vmem:[%s235] sm:%s227] %v236
            $region122: #{tpu_custom_call.1} parent=116 // loop_footer
              %s233 = sadd.s32 1, %s229
            $region123: #{tpu_custom_call.1} parent=116 // loop_footer_branch
              %228 = sbr.rel target = $region119
            $region124: #{tpu_custom_call.1} parent=116 // loop_exit
              _
          $region117: #{tpu_custom_call.1} parent=16 // pred_fallthru
            _
          // Predicated region
          $region136: #{tpu_custom_call.1} parent=16 // pred_check
            _
          $region137: #{tpu_custom_call.1} parent=16 // pred_check_branch
            %261 = sbr.rel (0) target = $region139
          $region138: #{tpu_custom_call.1} parent=16 // pred_region
            %262 = vsyncadd [#allocation4], 16
          $region139: #{tpu_custom_call.1} parent=16 // pred_fallthru
            _
          %s263 = smul.u32 %s67, 9
          %s264 = sld [smem:[#allocation7 + %s263]]
          %s265 = scalar_lea.vmem %s3, %s264
          %s266 = scalar_lea.vmem [#allocation3], %s62
          %p268 = scmp.lt.u32.totalorder 1, 8
          %p269 = pneg %p268
          // Predicated region
          $region140: #{tpu_custom_call.1} parent=16 // pred_check
            _
          $region141: #{tpu_custom_call.1} parent=16 // pred_check_branch
            %271 = sbr.rel (%p268) target = $region143
          $region142: #{tpu_custom_call.1} parent=16 // pred_region
            %s286 = sand.u32 1, 7
            %p287 = scmp.eq.s32.totalorder %s286, 0
            %p288 = pneg %p287
            // Predicated region
            $region155: #{tpu_custom_call.1} parent=142 // pred_check
              _
            $region156: #{tpu_custom_call.1} parent=142 // pred_check_branch
              %290 = sbr.rel (%p287) target = $region158
            $region157: #{tpu_custom_call.1} parent=142 // pred_region
              %s291 = sand.u32 1, 7
              %s292 = ssub.s32 1, %s291
              %s293 = scalar_lea.vmem %s265, %s292
              %s294 = ssub.s32 1, %s291
              %s295 = scalar_lea.vmem %s266, %s294 [#allocation3]
              %s296 = sshllo.u32 0, %s291
              loop: start=0, step=1, limit=1
              $region159: #{tpu_custom_call.1} parent=157 // loop_pre_header
                _
              $region160: #{tpu_custom_call.1} parent=157 // loop_header
                %s298 = sphi 0, %s302
                %p299 = scmp.ge.s32.totalorder %s298, 1
                %s303 = sphi %s293, %s293
                %s304 = sphi %s295, %s295
              $region161: #{tpu_custom_call.1} parent=157 // loop_header_branch
                %301 = sbr.rel (%p299) target = $region165
              $region162: #{tpu_custom_call.1} parent=157 // loop_body
                %v305 = vld [vmem:[%s303] sm:%s296]
                %306 = vst [vmem:[%s304] sm:%s296] %v305
              $region163: #{tpu_custom_call.1} parent=157 // loop_footer
                %s302 = sadd.s32 1, %s298
              $region164: #{tpu_custom_call.1} parent=157 // loop_footer_branch
                %297 = sbr.rel target = $region160
              $region165: #{tpu_custom_call.1} parent=157 // loop_exit
                _
            $region158: #{tpu_custom_call.1} parent=142 // pred_fallthru
              _
          $region143: #{tpu_custom_call.1} parent=16 // pred_fallthru
            _
          // Predicated region
          $region144: #{tpu_custom_call.1} parent=16 // pred_check
            %p272 = pneg %p268
          $region145: #{tpu_custom_call.1} parent=16 // pred_check_branch
            %274 = sbr.rel (%p272) target = $region147
          $region146: #{tpu_custom_call.1} parent=16 // pred_region
            %s275 = sshllo.u32 0, 1
            loop: start=0, step=1, limit=1
            $region148: #{tpu_custom_call.1} parent=146 // loop_pre_header
              _
            $region149: #{tpu_custom_call.1} parent=146 // loop_header
              %s277 = sphi 0, %s281
              %p278 = scmp.ge.s32.totalorder %s277, 1
              %s282 = sphi %s265, %s265
              %s283 = sphi %s266, %s266
            $region150: #{tpu_custom_call.1} parent=146 // loop_header_branch
              %280 = sbr.rel (%p278) target = $region154
            $region151: #{tpu_custom_call.1} parent=146 // loop_body
              %v284 = vld [vmem:[%s282] sm:%s275]
              %285 = vst [vmem:[%s283] sm:%s275] %v284
            $region152: #{tpu_custom_call.1} parent=146 // loop_footer
              %s281 = sadd.s32 1, %s277
            $region153: #{tpu_custom_call.1} parent=146 // loop_footer_branch
              %276 = sbr.rel target = $region149
            $region154: #{tpu_custom_call.1} parent=146 // loop_exit
              _
          $region147: #{tpu_custom_call.1} parent=16 // pred_fallthru
            _
          // Predicated region
          $region166: #{tpu_custom_call.1} parent=16 // pred_check
            _
          $region167: #{tpu_custom_call.1} parent=16 // pred_check_branch
            %309 = sbr.rel (0) target = $region169
          $region168: #{tpu_custom_call.1} parent=16 // pred_region
            %310 = vsyncadd [#allocation4], 16
          $region169: #{tpu_custom_call.1} parent=16 // pred_fallthru
            _
          %s311 = sadd.s32 %s263, 1
          %s312 = sld [smem:[#allocation7 + %s311]]
          %s313 = scalar_lea.vmem %s3, %s312
          %s314 = scalar_lea.vmem [#allocation3], %s118
          %p316 = scmp.lt.u32.totalorder 1, 8
          %p317 = pneg %p316
          // Predicated region
          $region170: #{tpu_custom_call.1} parent=16 // pred_check
            _
          $region171: #{tpu_custom_call.1} parent=16 // pred_check_branch
            %319 = sbr.rel (%p316) target = $region173
          $region172: #{tpu_custom_call.1} parent=16 // pred_region
            %s334 = sand.u32 1, 7
            %p335 = scmp.eq.s32.totalorder %s334, 0
            %p336 = pneg %p335
            // Predicated region
            $region185: #{tpu_custom_call.1} parent=172 // pred_check
              _
            $region186: #{tpu_custom_call.1} parent=172 // pred_check_branch
              %338 = sbr.rel (%p335) target = $region188
            $region187: #{tpu_custom_call.1} parent=172 // pred_region
              %s339 = sand.u32 1, 7
              %s340 = ssub.s32 1, %s339
              %s341 = scalar_lea.vmem %s313, %s340
              %s342 = ssub.s32 1, %s339
              %s343 = scalar_lea.vmem %s314, %s342 [#allocation3]
              %s344 = sshllo.u32 0, %s339
              loop: start=0, step=1, limit=1
              $region189: #{tpu_custom_call.1} parent=187 // loop_pre_header
                _
              $region190: #{tpu_custom_call.1} parent=187 // loop_header
                %s346 = sphi 0, %s350
                %p347 = scmp.ge.s32.totalorder %s346, 1
                %s351 = sphi %s341, %s341
                %s352 = sphi %s343, %s343
              $region191: #{tpu_custom_call.1} parent=187 // loop_header_branch
                %349 = sbr.rel (%p347) target = $region195
              $region192: #{tpu_custom_call.1} parent=187 // loop_body
                %v353 = vld [vmem:[%s351] sm:%s344]
                %354 = vst [vmem:[%s352] sm:%s344] %v353
              $region193: #{tpu_custom_call.1} parent=187 // loop_footer
                %s350 = sadd.s32 1, %s346
              $region194: #{tpu_custom_call.1} parent=187 // loop_footer_branch
                %345 = sbr.rel target = $region190
              $region195: #{tpu_custom_call.1} parent=187 // loop_exit
                _
            $region188: #{tpu_custom_call.1} parent=172 // pred_fallthru
              _
          $region173: #{tpu_custom_call.1} parent=16 // pred_fallthru
            _
          // Predicated region
          $region174: #{tpu_custom_call.1} parent=16 // pred_check
            %p320 = pneg %p316
          $region175: #{tpu_custom_call.1} parent=16 // pred_check_branch
            %322 = sbr.rel (%p320) target = $region177
          $region176: #{tpu_custom_call.1} parent=16 // pred_region
            %s323 = sshllo.u32 0, 1
            loop: start=0, step=1, limit=1
            $region178: #{tpu_custom_call.1} parent=176 // loop_pre_header
              _
            $region179: #{tpu_custom_call.1} parent=176 // loop_header
              %s325 = sphi 0, %s329
              %p326 = scmp.ge.s32.totalorder %s325, 1
              %s330 = sphi %s313, %s313
              %s331 = sphi %s314, %s314
            $region180: #{tpu_custom_call.1} parent=176 // loop_header_branch
              %328 = sbr.rel (%p326) target = $region184
            $region181: #{tpu_custom_call.1} parent=176 // loop_body
              %v332 = vld [vmem:[%s330] sm:%s323]
              %333 = vst [vmem:[%s331] sm:%s323] %v332
            $region182: #{tpu_custom_call.1} parent=176 // loop_footer
              %s329 = sadd.s32 1, %s325
            $region183: #{tpu_custom_call.1} parent=176 // loop_footer_branch
              %324 = sbr.rel target = $region179
            $region184: #{tpu_custom_call.1} parent=176 // loop_exit
              _
          $region177: #{tpu_custom_call.1} parent=16 // pred_fallthru
            _
          // Predicated region
          $region196: #{tpu_custom_call.1} parent=16 // pred_check
            _
          $region197: #{tpu_custom_call.1} parent=16 // pred_check_branch
            %357 = sbr.rel (0) target = $region199
          $region198: #{tpu_custom_call.1} parent=16 // pred_region
            %358 = vsyncadd [#allocation4], 16
          $region199: #{tpu_custom_call.1} parent=16 // pred_fallthru
            _
          %s359 = sadd.s32 %s263, 2
          %s360 = sld [smem:[#allocation7 + %s359]]
          %s361 = scalar_lea.vmem %s3, %s360
          %s362 = scalar_lea.vmem [#allocation3], %s167
          %p364 = scmp.lt.u32.totalorder 1, 8
          %p365 = pneg %p364
          // Predicated region
          $region200: #{tpu_custom_call.1} parent=16 // pred_check
            _
          $region201: #{tpu_custom_call.1} parent=16 // pred_check_branch
            %367 = sbr.rel (%p364) target = $region203
          $region202: #{tpu_custom_call.1} parent=16 // pred_region
            %s382 = sand.u32 1, 7
            %p383 = scmp.eq.s32.totalorder %s382, 0
            %p384 = pneg %p383
            // Predicated region
            $region215: #{tpu_custom_call.1} parent=202 // pred_check
              _
            $region216: #{tpu_custom_call.1} parent=202 // pred_check_branch
              %386 = sbr.rel (%p383) target = $region218
            $region217: #{tpu_custom_call.1} parent=202 // pred_region
              %s387 = sand.u32 1, 7
              %s388 = ssub.s32 1, %s387
              %s389 = scalar_lea.vmem %s361, %s388
              %s390 = ssub.s32 1, %s387
              %s391 = scalar_lea.vmem %s362, %s390 [#allocation3]
              %s392 = sshllo.u32 0, %s387
              loop: start=0, step=1, limit=1
              $region219: #{tpu_custom_call.1} parent=217 // loop_pre_header
                _
              $region220: #{tpu_custom_call.1} parent=217 // loop_header
                %s394 = sphi 0, %s398
                %p395 = scmp.ge.s32.totalorder %s394, 1
                %s399 = sphi %s389, %s389
                %s400 = sphi %s391, %s391
              $region221: #{tpu_custom_call.1} parent=217 // loop_header_branch
                %397 = sbr.rel (%p395) target = $region225
              $region222: #{tpu_custom_call.1} parent=217 // loop_body
                %v401 = vld [vmem:[%s399] sm:%s392]
                %402 = vst [vmem:[%s400] sm:%s392] %v401
              $region223: #{tpu_custom_call.1} parent=217 // loop_footer
                %s398 = sadd.s32 1, %s394
              $region224: #{tpu_custom_call.1} parent=217 // loop_footer_branch
                %393 = sbr.rel target = $region220
              $region225: #{tpu_custom_call.1} parent=217 // loop_exit
                _
            $region218: #{tpu_custom_call.1} parent=202 // pred_fallthru
              _
          $region203: #{tpu_custom_call.1} parent=16 // pred_fallthru
            _
          // Predicated region
          $region204: #{tpu_custom_call.1} parent=16 // pred_check
            %p368 = pneg %p364
          $region205: #{tpu_custom_call.1} parent=16 // pred_check_branch
            %370 = sbr.rel (%p368) target = $region207
          $region206: #{tpu_custom_call.1} parent=16 // pred_region
            %s371 = sshllo.u32 0, 1
            loop: start=0, step=1, limit=1
            $region208: #{tpu_custom_call.1} parent=206 // loop_pre_header
              _
            $region209: #{tpu_custom_call.1} parent=206 // loop_header
              %s373 = sphi 0, %s377
              %p374 = scmp.ge.s32.totalorder %s373, 1
              %s378 = sphi %s361, %s361
              %s379 = sphi %s362, %s362
            $region210: #{tpu_custom_call.1} parent=206 // loop_header_branch
              %376 = sbr.rel (%p374) target = $region214
            $region211: #{tpu_custom_call.1} parent=206 // loop_body
              %v380 = vld [vmem:[%s378] sm:%s371]
              %381 = vst [vmem:[%s379] sm:%s371] %v380
            $region212: #{tpu_custom_call.1} parent=206 // loop_footer
              %s377 = sadd.s32 1, %s373
            $region213: #{tpu_custom_call.1} parent=206 // loop_footer_branch
              %372 = sbr.rel target = $region209
            $region214: #{tpu_custom_call.1} parent=206 // loop_exit
              _
          $region207: #{tpu_custom_call.1} parent=16 // pred_fallthru
            _
          // Predicated region
          $region226: #{tpu_custom_call.1} parent=16 // pred_check
            _
          $region227: #{tpu_custom_call.1} parent=16 // pred_check_branch
            %405 = sbr.rel (0) target = $region229
          $region228: #{tpu_custom_call.1} parent=16 // pred_region
            %406 = vsyncadd [#allocation4], 16
          $region229: #{tpu_custom_call.1} parent=16 // pred_fallthru
            _
          %s407 = sadd.s32 %s263, 3
          %s408 = sld [smem:[#allocation7 + %s407]]
          %s409 = scalar_lea.vmem %s3, %s408
          %s410 = scalar_lea.vmem [#allocation3], %s216
          %p412 = scmp.lt.u32.totalorder 1, 8
          %p413 = pneg %p412
          // Predicated region
          $region230: #{tpu_custom_call.1} parent=16 // pred_check
            _
          $region231: #{tpu_custom_call.1} parent=16 // pred_check_branch
            %415 = sbr.rel (%p412) target = $region233
          $region232: #{tpu_custom_call.1} parent=16 // pred_region
            %s430 = sand.u32 1, 7
            %p431 = scmp.eq.s32.totalorder %s430, 0
            %p432 = pneg %p431
            // Predicated region
            $region245: #{tpu_custom_call.1} parent=232 // pred_check
              _
            $region246: #{tpu_custom_call.1} parent=232 // pred_check_branch
              %434 = sbr.rel (%p431) target = $region248
            $region247: #{tpu_custom_call.1} parent=232 // pred_region
              %s435 = sand.u32 1, 7
              %s436 = ssub.s32 1, %s435
              %s437 = scalar_lea.vmem %s409, %s436
              %s438 = ssub.s32 1, %s435
              %s439 = scalar_lea.vmem %s410, %s438 [#allocation3]
              %s440 = sshllo.u32 0, %s435
              loop: start=0, step=1, limit=1
              $region249: #{tpu_custom_call.1} parent=247 // loop_pre_header
                _
              $region250: #{tpu_custom_call.1} parent=247 // loop_header
                %s442 = sphi 0, %s446
                %p443 = scmp.ge.s32.totalorder %s442, 1
                %s447 = sphi %s437, %s437
                %s448 = sphi %s439, %s439
              $region251: #{tpu_custom_call.1} parent=247 // loop_header_branch
                %445 = sbr.rel (%p443) target = $region255
              $region252: #{tpu_custom_call.1} parent=247 // loop_body
                %v449 = vld [vmem:[%s447] sm:%s440]
                %450 = vst [vmem:[%s448] sm:%s440] %v449
              $region253: #{tpu_custom_call.1} parent=247 // loop_footer
                %s446 = sadd.s32 1, %s442
              $region254: #{tpu_custom_call.1} parent=247 // loop_footer_branch
                %441 = sbr.rel target = $region250
              $region255: #{tpu_custom_call.1} parent=247 // loop_exit
                _
            $region248: #{tpu_custom_call.1} parent=232 // pred_fallthru
              _
          $region233: #{tpu_custom_call.1} parent=16 // pred_fallthru
            _
          // Predicated region
          $region234: #{tpu_custom_call.1} parent=16 // pred_check
            %p416 = pneg %p412
          $region235: #{tpu_custom_call.1} parent=16 // pred_check_branch
            %418 = sbr.rel (%p416) target = $region237
          $region236: #{tpu_custom_call.1} parent=16 // pred_region
            %s419 = sshllo.u32 0, 1
            loop: start=0, step=1, limit=1
            $region238: #{tpu_custom_call.1} parent=236 // loop_pre_header
              _
            $region239: #{tpu_custom_call.1} parent=236 // loop_header
              %s421 = sphi 0, %s425
              %p422 = scmp.ge.s32.totalorder %s421, 1
              %s426 = sphi %s409, %s409
              %s427 = sphi %s410, %s410
            $region240: #{tpu_custom_call.1} parent=236 // loop_header_branch
              %424 = sbr.rel (%p422) target = $region244
            $region241: #{tpu_custom_call.1} parent=236 // loop_body
              %v428 = vld [vmem:[%s426] sm:%s419]
              %429 = vst [vmem:[%s427] sm:%s419] %v428
            $region242: #{tpu_custom_call.1} parent=236 // loop_footer
              %s425 = sadd.s32 1, %s421
            $region243: #{tpu_custom_call.1} parent=236 // loop_footer_branch
              %420 = sbr.rel target = $region239
            $region244: #{tpu_custom_call.1} parent=236 // loop_exit
              _
          $region237: #{tpu_custom_call.1} parent=16 // pred_fallthru
            _
          // Predicated region
          $region256: #{tpu_custom_call.1} parent=16 // pred_check
            _
          $region257: #{tpu_custom_call.1} parent=16 // pred_check_branch
            %453 = sbr.rel (0) target = $region259
          $region258: #{tpu_custom_call.1} parent=16 // pred_region
            %454 = vsyncadd [#allocation4], 16
          $region259: #{tpu_custom_call.1} parent=16 // pred_fallthru
            _
          %s455 = sadd.s32 %s263, 4
          %s456 = sld [smem:[#allocation7 + %s455]]
          %s457 = sadd.s32 %s62, 32
          %s458 = scalar_lea.vmem %s3, %s456
          %s459 = scalar_lea.vmem [#allocation3], %s457
          %p461 = scmp.lt.u32.totalorder 1, 8
          %p462 = pneg %p461
          // Predicated region
          $region260: #{tpu_custom_call.1} parent=16 // pred_check
            _
          $region261: #{tpu_custom_call.1} parent=16 // pred_check_branch
            %464 = sbr.rel (%p461) target = $region263
          $region262: #{tpu_custom_call.1} parent=16 // pred_region
            %s479 = sand.u32 1, 7
            %p480 = scmp.eq.s32.totalorder %s479, 0
            %p481 = pneg %p480
            // Predicated region
            $region275: #{tpu_custom_call.1} parent=262 // pred_check
              _
            $region276: #{tpu_custom_call.1} parent=262 // pred_check_branch
              %483 = sbr.rel (%p480) target = $region278
            $region277: #{tpu_custom_call.1} parent=262 // pred_region
              %s484 = sand.u32 1, 7
              %s485 = ssub.s32 1, %s484
              %s486 = scalar_lea.vmem %s458, %s485
              %s487 = ssub.s32 1, %s484
              %s488 = scalar_lea.vmem %s459, %s487 [#allocation3]
              %s489 = sshllo.u32 0, %s484
              loop: start=0, step=1, limit=1
              $region279: #{tpu_custom_call.1} parent=277 // loop_pre_header
                _
              $region280: #{tpu_custom_call.1} parent=277 // loop_header
                %s491 = sphi 0, %s495
                %p492 = scmp.ge.s32.totalorder %s491, 1
                %s496 = sphi %s486, %s486
                %s497 = sphi %s488, %s488
              $region281: #{tpu_custom_call.1} parent=277 // loop_header_branch
                %494 = sbr.rel (%p492) target = $region285
              $region282: #{tpu_custom_call.1} parent=277 // loop_body
                %v498 = vld [vmem:[%s496] sm:%s489]
                %499 = vst [vmem:[%s497] sm:%s489] %v498
              $region283: #{tpu_custom_call.1} parent=277 // loop_footer
                %s495 = sadd.s32 1, %s491
              $region284: #{tpu_custom_call.1} parent=277 // loop_footer_branch
                %490 = sbr.rel target = $region280
              $region285: #{tpu_custom_call.1} parent=277 // loop_exit
                _
            $region278: #{tpu_custom_call.1} parent=262 // pred_fallthru
              _
          $region263: #{tpu_custom_call.1} parent=16 // pred_fallthru
            _
          // Predicated region
          $region264: #{tpu_custom_call.1} parent=16 // pred_check
            %p465 = pneg %p461
          $region265: #{tpu_custom_call.1} parent=16 // pred_check_branch
            %467 = sbr.rel (%p465) target = $region267
          $region266: #{tpu_custom_call.1} parent=16 // pred_region
            %s468 = sshllo.u32 0, 1
            loop: start=0, step=1, limit=1
            $region268: #{tpu_custom_call.1} parent=266 // loop_pre_header
              _
            $region269: #{tpu_custom_call.1} parent=266 // loop_header
              %s470 = sphi 0, %s474
              %p471 = scmp.ge.s32.totalorder %s470, 1
              %s475 = sphi %s458, %s458
              %s476 = sphi %s459, %s459
            $region270: #{tpu_custom_call.1} parent=266 // loop_header_branch
              %473 = sbr.rel (%p471) target = $region274
            $region271: #{tpu_custom_call.1} parent=266 // loop_body
              %v477 = vld [vmem:[%s475] sm:%s468]
              %478 = vst [vmem:[%s476] sm:%s468] %v477
            $region272: #{tpu_custom_call.1} parent=266 // loop_footer
              %s474 = sadd.s32 1, %s470
            $region273: #{tpu_custom_call.1} parent=266 // loop_footer_branch
              %469 = sbr.rel target = $region269
            $region274: #{tpu_custom_call.1} parent=266 // loop_exit
              _
          $region267: #{tpu_custom_call.1} parent=16 // pred_fallthru
            _
          // Predicated region
          $region286: #{tpu_custom_call.1} parent=16 // pred_check
            _
          $region287: #{tpu_custom_call.1} parent=16 // pred_check_branch
            %502 = sbr.rel (0) target = $region289
          $region288: #{tpu_custom_call.1} parent=16 // pred_region
            %503 = vsyncadd [#allocation4], 16
          $region289: #{tpu_custom_call.1} parent=16 // pred_fallthru
            _
          %s504 = sadd.s32 %s263, 5
          %s505 = sld [smem:[#allocation7 + %s504]]
          %s506 = sadd.s32 %s62, 40
          %s507 = scalar_lea.vmem %s3, %s505
          %s508 = scalar_lea.vmem [#allocation3], %s506
          %p510 = scmp.lt.u32.totalorder 1, 8
          %p511 = pneg %p510
          // Predicated region
          $region290: #{tpu_custom_call.1} parent=16 // pred_check
            _
          $region291: #{tpu_custom_call.1} parent=16 // pred_check_branch
            %513 = sbr.rel (%p510) target = $region293
          $region292: #{tpu_custom_call.1} parent=16 // pred_region
            %s528 = sand.u32 1, 7
            %p529 = scmp.eq.s32.totalorder %s528, 0
            %p530 = pneg %p529
            // Predicated region
            $region305: #{tpu_custom_call.1} parent=292 // pred_check
              _
            $region306: #{tpu_custom_call.1} parent=292 // pred_check_branch
              %532 = sbr.rel (%p529) target = $region308
            $region307: #{tpu_custom_call.1} parent=292 // pred_region
              %s533 = sand.u32 1, 7
              %s534 = ssub.s32 1, %s533
              %s535 = scalar_lea.vmem %s507, %s534
              %s536 = ssub.s32 1, %s533
              %s537 = scalar_lea.vmem %s508, %s536 [#allocation3]
              %s538 = sshllo.u32 0, %s533
              loop: start=0, step=1, limit=1
              $region309: #{tpu_custom_call.1} parent=307 // loop_pre_header
                _
              $region310: #{tpu_custom_call.1} parent=307 // loop_header
                %s540 = sphi 0, %s544
                %p541 = scmp.ge.s32.totalorder %s540, 1
                %s545 = sphi %s535, %s535
                %s546 = sphi %s537, %s537
              $region311: #{tpu_custom_call.1} parent=307 // loop_header_branch
                %543 = sbr.rel (%p541) target = $region315
              $region312: #{tpu_custom_call.1} parent=307 // loop_body
                %v547 = vld [vmem:[%s545] sm:%s538]
                %548 = vst [vmem:[%s546] sm:%s538] %v547
              $region313: #{tpu_custom_call.1} parent=307 // loop_footer
                %s544 = sadd.s32 1, %s540
              $region314: #{tpu_custom_call.1} parent=307 // loop_footer_branch
                %539 = sbr.rel target = $region310
              $region315: #{tpu_custom_call.1} parent=307 // loop_exit
                _
            $region308: #{tpu_custom_call.1} parent=292 // pred_fallthru
              _
          $region293: #{tpu_custom_call.1} parent=16 // pred_fallthru
            _
          // Predicated region
          $region294: #{tpu_custom_call.1} parent=16 // pred_check
            %p514 = pneg %p510
          $region295: #{tpu_custom_call.1} parent=16 // pred_check_branch
            %516 = sbr.rel (%p514) target = $region297
          $region296: #{tpu_custom_call.1} parent=16 // pred_region
            %s517 = sshllo.u32 0, 1
            loop: start=0, step=1, limit=1
            $region298: #{tpu_custom_call.1} parent=296 // loop_pre_header
              _
            $region299: #{tpu_custom_call.1} parent=296 // loop_header
              %s519 = sphi 0, %s523
              %p520 = scmp.ge.s32.totalorder %s519, 1
              %s524 = sphi %s507, %s507
              %s525 = sphi %s508, %s508
            $region300: #{tpu_custom_call.1} parent=296 // loop_header_branch
              %522 = sbr.rel (%p520) target = $region304
            $region301: #{tpu_custom_call.1} parent=296 // loop_body
              %v526 = vld [vmem:[%s524] sm:%s517]
              %527 = vst [vmem:[%s525] sm:%s517] %v526
            $region302: #{tpu_custom_call.1} parent=296 // loop_footer
              %s523 = sadd.s32 1, %s519
            $region303: #{tpu_custom_call.1} parent=296 // loop_footer_branch
              %518 = sbr.rel target = $region299
            $region304: #{tpu_custom_call.1} parent=296 // loop_exit
              _
          $region297: #{tpu_custom_call.1} parent=16 // pred_fallthru
            _
          // Predicated region
          $region316: #{tpu_custom_call.1} parent=16 // pred_check
            _
          $region317: #{tpu_custom_call.1} parent=16 // pred_check_branch
            %551 = sbr.rel (0) target = $region319
          $region318: #{tpu_custom_call.1} parent=16 // pred_region
            %552 = vsyncadd [#allocation4], 16
          $region319: #{tpu_custom_call.1} parent=16 // pred_fallthru
            _
          %s553 = sadd.s32 %s263, 6
          %s554 = sld [smem:[#allocation7 + %s553]]
          %s555 = sadd.s32 %s62, 48
          %s556 = scalar_lea.vmem %s3, %s554
          %s557 = scalar_lea.vmem [#allocation3], %s555
          %p559 = scmp.lt.u32.totalorder 1, 8
          %p560 = pneg %p559
          // Predicated region
          $region320: #{tpu_custom_call.1} parent=16 // pred_check
            _
          $region321: #{tpu_custom_call.1} parent=16 // pred_check_branch
            %562 = sbr.rel (%p559) target = $region323
          $region322: #{tpu_custom_call.1} parent=16 // pred_region
            %s577 = sand.u32 1, 7
            %p578 = scmp.eq.s32.totalorder %s577, 0
            %p579 = pneg %p578
            // Predicated region
            $region335: #{tpu_custom_call.1} parent=322 // pred_check
              _
            $region336: #{tpu_custom_call.1} parent=322 // pred_check_branch
              %581 = sbr.rel (%p578) target = $region338
            $region337: #{tpu_custom_call.1} parent=322 // pred_region
              %s582 = sand.u32 1, 7
              %s583 = ssub.s32 1, %s582
              %s584 = scalar_lea.vmem %s556, %s583
              %s585 = ssub.s32 1, %s582
              %s586 = scalar_lea.vmem %s557, %s585 [#allocation3]
              %s587 = sshllo.u32 0, %s582
              loop: start=0, step=1, limit=1
              $region339: #{tpu_custom_call.1} parent=337 // loop_pre_header
                _
              $region340: #{tpu_custom_call.1} parent=337 // loop_header
                %s589 = sphi 0, %s593
                %p590 = scmp.ge.s32.totalorder %s589, 1
                %s594 = sphi %s584, %s584
                %s595 = sphi %s586, %s586
              $region341: #{tpu_custom_call.1} parent=337 // loop_header_branch
                %592 = sbr.rel (%p590) target = $region345
              $region342: #{tpu_custom_call.1} parent=337 // loop_body
                %v596 = vld [vmem:[%s594] sm:%s587]
                %597 = vst [vmem:[%s595] sm:%s587] %v596
              $region343: #{tpu_custom_call.1} parent=337 // loop_footer
                %s593 = sadd.s32 1, %s589
              $region344: #{tpu_custom_call.1} parent=337 // loop_footer_branch
                %588 = sbr.rel target = $region340
              $region345: #{tpu_custom_call.1} parent=337 // loop_exit
                _
            $region338: #{tpu_custom_call.1} parent=322 // pred_fallthru
              _
          $region323: #{tpu_custom_call.1} parent=16 // pred_fallthru
            _
          // Predicated region
          $region324: #{tpu_custom_call.1} parent=16 // pred_check
            %p563 = pneg %p559
          $region325: #{tpu_custom_call.1} parent=16 // pred_check_branch
            %565 = sbr.rel (%p563) target = $region327
          $region326: #{tpu_custom_call.1} parent=16 // pred_region
            %s566 = sshllo.u32 0, 1
            loop: start=0, step=1, limit=1
            $region328: #{tpu_custom_call.1} parent=326 // loop_pre_header
              _
            $region329: #{tpu_custom_call.1} parent=326 // loop_header
              %s568 = sphi 0, %s572
              %p569 = scmp.ge.s32.totalorder %s568, 1
              %s573 = sphi %s556, %s556
              %s574 = sphi %s557, %s557
            $region330: #{tpu_custom_call.1} parent=326 // loop_header_branch
              %571 = sbr.rel (%p569) target = $region334
            $region331: #{tpu_custom_call.1} parent=326 // loop_body
              %v575 = vld [vmem:[%s573] sm:%s566]
              %576 = vst [vmem:[%s574] sm:%s566] %v575
            $region332: #{tpu_custom_call.1} parent=326 // loop_footer
              %s572 = sadd.s32 1, %s568
            $region333: #{tpu_custom_call.1} parent=326 // loop_footer_branch
              %567 = sbr.rel target = $region329
            $region334: #{tpu_custom_call.1} parent=326 // loop_exit
              _
          $region327: #{tpu_custom_call.1} parent=16 // pred_fallthru
            _
          // Predicated region
          $region346: #{tpu_custom_call.1} parent=16 // pred_check
            _
          $region347: #{tpu_custom_call.1} parent=16 // pred_check_branch
            %600 = sbr.rel (0) target = $region349
          $region348: #{tpu_custom_call.1} parent=16 // pred_region
            %601 = vsyncadd [#allocation4], 16
          $region349: #{tpu_custom_call.1} parent=16 // pred_fallthru
            _
          %s602 = sadd.s32 %s263, 7
          %s603 = sld [smem:[#allocation7 + %s602]]
          %s604 = sadd.s32 %s62, 56
          %s605 = scalar_lea.vmem %s3, %s603
          %s606 = scalar_lea.vmem [#allocation3], %s604
          %p608 = scmp.lt.u32.totalorder 1, 8
          %p609 = pneg %p608
          // Predicated region
          $region350: #{tpu_custom_call.1} parent=16 // pred_check
            _
          $region351: #{tpu_custom_call.1} parent=16 // pred_check_branch
            %611 = sbr.rel (%p608) target = $region353
          $region352: #{tpu_custom_call.1} parent=16 // pred_region
            %s626 = sand.u32 1, 7
            %p627 = scmp.eq.s32.totalorder %s626, 0
            %p628 = pneg %p627
            // Predicated region
            $region365: #{tpu_custom_call.1} parent=352 // pred_check
              _
            $region366: #{tpu_custom_call.1} parent=352 // pred_check_branch
              %630 = sbr.rel (%p627) target = $region368
            $region367: #{tpu_custom_call.1} parent=352 // pred_region
              %s631 = sand.u32 1, 7
              %s632 = ssub.s32 1, %s631
              %s633 = scalar_lea.vmem %s605, %s632
              %s634 = ssub.s32 1, %s631
              %s635 = scalar_lea.vmem %s606, %s634 [#allocation3]
              %s636 = sshllo.u32 0, %s631
              loop: start=0, step=1, limit=1
              $region369: #{tpu_custom_call.1} parent=367 // loop_pre_header
                _
              $region370: #{tpu_custom_call.1} parent=367 // loop_header
                %s638 = sphi 0, %s642
                %p639 = scmp.ge.s32.totalorder %s638, 1
                %s643 = sphi %s633, %s633
                %s644 = sphi %s635, %s635
              $region371: #{tpu_custom_call.1} parent=367 // loop_header_branch
                %641 = sbr.rel (%p639) target = $region375
              $region372: #{tpu_custom_call.1} parent=367 // loop_body
                %v645 = vld [vmem:[%s643] sm:%s636]
                %646 = vst [vmem:[%s644] sm:%s636] %v645
              $region373: #{tpu_custom_call.1} parent=367 // loop_footer
                %s642 = sadd.s32 1, %s638
              $region374: #{tpu_custom_call.1} parent=367 // loop_footer_branch
                %637 = sbr.rel target = $region370
              $region375: #{tpu_custom_call.1} parent=367 // loop_exit
                _
            $region368: #{tpu_custom_call.1} parent=352 // pred_fallthru
              _
          $region353: #{tpu_custom_call.1} parent=16 // pred_fallthru
            _
          // Predicated region
          $region354: #{tpu_custom_call.1} parent=16 // pred_check
            %p612 = pneg %p608
          $region355: #{tpu_custom_call.1} parent=16 // pred_check_branch
            %614 = sbr.rel (%p612) target = $region357
          $region356: #{tpu_custom_call.1} parent=16 // pred_region
            %s615 = sshllo.u32 0, 1
            loop: start=0, step=1, limit=1
            $region358: #{tpu_custom_call.1} parent=356 // loop_pre_header
              _
            $region359: #{tpu_custom_call.1} parent=356 // loop_header
              %s617 = sphi 0, %s621
              %p618 = scmp.ge.s32.totalorder %s617, 1
              %s622 = sphi %s605, %s605
              %s623 = sphi %s606, %s606
            $region360: #{tpu_custom_call.1} parent=356 // loop_header_branch
              %620 = sbr.rel (%p618) target = $region364
            $region361: #{tpu_custom_call.1} parent=356 // loop_body
              %v624 = vld [vmem:[%s622] sm:%s615]
              %625 = vst [vmem:[%s623] sm:%s615] %v624
            $region362: #{tpu_custom_call.1} parent=356 // loop_footer
              %s621 = sadd.s32 1, %s617
            $region363: #{tpu_custom_call.1} parent=356 // loop_footer_branch
              %616 = sbr.rel target = $region359
            $region364: #{tpu_custom_call.1} parent=356 // loop_exit
              _
          $region357: #{tpu_custom_call.1} parent=16 // pred_fallthru
            _
          // Predicated region
          $region376: #{tpu_custom_call.1} parent=16 // pred_check
            _
          $region377: #{tpu_custom_call.1} parent=16 // pred_check_branch
            %649 = sbr.rel (0) target = $region379
          $region378: #{tpu_custom_call.1} parent=16 // pred_region
            %650 = vsyncadd [#allocation4], 16
          $region379: #{tpu_custom_call.1} parent=16 // pred_fallthru
            _
          %s651 = sadd.s32 %s263, 8
          %s652 = sld [smem:[#allocation7 + %s651]]
          %s653 = sadd.s32 %s62, 64
          %s654 = scalar_lea.vmem %s3, %s652
          %s655 = scalar_lea.vmem [#allocation3], %s653
          %p657 = scmp.lt.u32.totalorder 1, 8
          %p658 = pneg %p657
          // Predicated region
          $region380: #{tpu_custom_call.1} parent=16 // pred_check
            _
          $region381: #{tpu_custom_call.1} parent=16 // pred_check_branch
            %660 = sbr.rel (%p657) target = $region383
          $region382: #{tpu_custom_call.1} parent=16 // pred_region
            %s675 = sand.u32 1, 7
            %p676 = scmp.eq.s32.totalorder %s675, 0
            %p677 = pneg %p676
            // Predicated region
            $region395: #{tpu_custom_call.1} parent=382 // pred_check
              _
            $region396: #{tpu_custom_call.1} parent=382 // pred_check_branch
              %679 = sbr.rel (%p676) target = $region398
            $region397: #{tpu_custom_call.1} parent=382 // pred_region
              %s680 = sand.u32 1, 7
              %s681 = ssub.s32 1, %s680
              %s682 = scalar_lea.vmem %s654, %s681
              %s683 = ssub.s32 1, %s680
              %s684 = scalar_lea.vmem %s655, %s683 [#allocation3]
              %s685 = sshllo.u32 0, %s680
              loop: start=0, step=1, limit=1
              $region399: #{tpu_custom_call.1} parent=397 // loop_pre_header
                _
              $region400: #{tpu_custom_call.1} parent=397 // loop_header
                %s687 = sphi 0, %s691
                %p688 = scmp.ge.s32.totalorder %s687, 1
                %s692 = sphi %s682, %s682
                %s693 = sphi %s684, %s684
              $region401: #{tpu_custom_call.1} parent=397 // loop_header_branch
                %690 = sbr.rel (%p688) target = $region405
              $region402: #{tpu_custom_call.1} parent=397 // loop_body
                %v694 = vld [vmem:[%s692] sm:%s685]
                %695 = vst [vmem:[%s693] sm:%s685] %v694
              $region403: #{tpu_custom_call.1} parent=397 // loop_footer
                %s691 = sadd.s32 1, %s687
              $region404: #{tpu_custom_call.1} parent=397 // loop_footer_branch
                %686 = sbr.rel target = $region400
              $region405: #{tpu_custom_call.1} parent=397 // loop_exit
                _
            $region398: #{tpu_custom_call.1} parent=382 // pred_fallthru
              _
          $region383: #{tpu_custom_call.1} parent=16 // pred_fallthru
            _
          // Predicated region
          $region384: #{tpu_custom_call.1} parent=16 // pred_check
            %p661 = pneg %p657
          $region385: #{tpu_custom_call.1} parent=16 // pred_check_branch
            %663 = sbr.rel (%p661) target = $region387
          $region386: #{tpu_custom_call.1} parent=16 // pred_region
            %s664 = sshllo.u32 0, 1
            loop: start=0, step=1, limit=1
            $region388: #{tpu_custom_call.1} parent=386 // loop_pre_header
              _
            $region389: #{tpu_custom_call.1} parent=386 // loop_header
              %s666 = sphi 0, %s670
              %p667 = scmp.ge.s32.totalorder %s666, 1
              %s671 = sphi %s654, %s654
              %s672 = sphi %s655, %s655
            $region390: #{tpu_custom_call.1} parent=386 // loop_header_branch
              %669 = sbr.rel (%p667) target = $region394
            $region391: #{tpu_custom_call.1} parent=386 // loop_body
              %v673 = vld [vmem:[%s671] sm:%s664]
              %674 = vst [vmem:[%s672] sm:%s664] %v673
            $region392: #{tpu_custom_call.1} parent=386 // loop_footer
              %s670 = sadd.s32 1, %s666
            $region393: #{tpu_custom_call.1} parent=386 // loop_footer_branch
              %665 = sbr.rel target = $region389
            $region394: #{tpu_custom_call.1} parent=386 // loop_exit
              _
          $region387: #{tpu_custom_call.1} parent=16 // pred_fallthru
            _
          // Predicated region
          $region406: #{tpu_custom_call.1} parent=16 // pred_check
            _
          $region407: #{tpu_custom_call.1} parent=16 // pred_check_branch
            %698 = sbr.rel (0) target = $region409
          $region408: #{tpu_custom_call.1} parent=16 // pred_region
            %699 = vsyncadd [#allocation4], 16
          $region409: #{tpu_custom_call.1} parent=16 // pred_fallthru
            _
        $region17: #{tpu_custom_call.1} parent=11 // loop_footer
          %s66 = sadd.s32 1, %s62
        $region18: #{tpu_custom_call.1} parent=11 // loop_footer_branch
          %61 = sbr.rel target = $region14
        $region19: #{tpu_custom_call.1} parent=11 // loop_exit
          _
        loop: start=0, step=1, limit=8
        $region410: #{tpu_custom_call.1} parent=11 // loop_pre_header
          _
        $region411: #{tpu_custom_call.1} parent=11 // loop_header
          %s701 = sphi 0, %s705
          %p702 = scmp.ge.s32.totalorder %s701, 8
        $region412: #{tpu_custom_call.1} parent=11 // loop_header_branch
          %704 = sbr.rel (%p702) target = $region416
        $region413: #{tpu_custom_call.1} parent=11 // loop_body
          %s706 = smul.u32 1, 1
          %s707 = sshll.u32 %s706, 4
          %708 = dma.done [#allocation4], %s707
          %s709 = sshll.u32 %s706, 4
          %710 = dma.done [#allocation4], %s709
          %s711 = sshll.u32 %s706, 4
          %712 = dma.done [#allocation4], %s711
          %s713 = sshll.u32 %s706, 4
          %714 = dma.done [#allocation4], %s713
          %s715 = sshll.u32 %s706, 4
          %716 = dma.done [#allocation4], %s715
          %s717 = sshll.u32 %s706, 4
          %718 = dma.done [#allocation4], %s717
          %s719 = sshll.u32 %s706, 4
          %720 = dma.done [#allocation4], %s719
          %s721 = sshll.u32 %s706, 4
          %722 = dma.done [#allocation4], %s721
          %s723 = sshll.u32 %s706, 4
          %724 = dma.done [#allocation4], %s723
          %s725 = sshll.u32 %s706, 4
          %726 = dma.done [#allocation4], %s725
          %s727 = sshll.u32 %s706, 4
          %728 = dma.done [#allocation4], %s727
          %s729 = sshll.u32 %s706, 4
          %730 = dma.done [#allocation4], %s729
          %s731 = sshll.u32 %s706, 4
          %732 = dma.done [#allocation4], %s731
        $region414: #{tpu_custom_call.1} parent=11 // loop_footer
          %s705 = sadd.s32 1, %s701
        $region415: #{tpu_custom_call.1} parent=11 // loop_footer_branch
          %700 = sbr.rel target = $region411
        $region416: #{tpu_custom_call.1} parent=11 // loop_exit
          _
        %v733 = vld [vmem:[#allocation2] sm:$0xff]
        %v734 = vld [vmem:[#allocation2 + $0x8] sm:$0xff]
        %v735 = vadd.f32 %v733, %v734
        %v736 = vld [vmem:[#allocation2 + $0x10] sm:$0xff]
        %v737 = vadd.f32 %v735, %v736
        %v738 = vld [vmem:[#allocation2 + $0x18] sm:$0xff]
        %v739 = vadd.f32 %v737, %v738
        %v740 = vlaneseq
        %v741 = vshrl.u32 %v740, 7
        %v742 = vstv %s60
        %v743 = vadd.s32 %v742, %v741
        %vm744 = vcmp.lt.s32.totalorder %v743, 12
        %v745 = vld [vmem:[#allocation3] sm:$0xff]
        %v746 = vmul.f32 %v745, %v739
        %vm747 = vcmask 261120
        %v748 = vsel %vm747, %v746, 0.0
        %749 = vadd.xlane.f32.xlu0 %v748
        %v750 = vpop.xlane.xlu0 %749
        %v751 = vsub.f32 0.0, %v750
        %v752 = vmax.f32 %v751, 0.0
        %v753 = vand.u32 2147483647, %v751
        %v754 = vsub.f32 0.0, %v753
        %v755 = vmul.f32 %v754, 1.442695
        %v756 = vpow.pop %v755
        %v757 = vadd.f32 %v756, 1.0
        %v758 = vlog2.pop %v757
        %v759 = vmul.f32 %v758, 0.6931472
        %v760 = vmul.f32 -0.5, %v756
        %v761 = vadd.f32 %v760, 1.0
        %v762 = vmul.f32 %v761, %v756
        %v763 = vand.u32 2147483647, %v756
        %vm764 = vcmp.lt.f32.partialorder %v763, 0.0004427343
        %v765 = vsel %vm764, %v762, %v759
        %v766 = vadd.f32 %v752, %v765
        %v767 = vsel %vm744, %v766, 0.0
        %vm768 = vcmask 7168
        %v769 = vsel %vm768, %v767, 0.0
        %770 = vadd.xlane.f32.xlu0 %v769
        %v771 = vpop.xlane.xlu0 %770
        %v772 = vrot.slane %v771, 4
        %v773 = vadd.f32 %v771, %v772
        %v774 = vrot.slane %v773, 2
        %v775 = vadd.f32 %v773, %v774
        %v776 = vrot.slane %v775, 1
        %v777 = vadd.f32 %v775, %v776
        %s778 = vtos %v777
        %s779 = sadd.f32 %s778, 0.0
        %v780 = vld [vmem:[#allocation3 + $0x8] sm:$0xff]
        %v781 = vmul.f32 %v780, %v739
        %v782 = vsel %vm747, %v781, 0.0
        %783 = vadd.xlane.f32.xlu0 %v782
        %v784 = vpop.xlane.xlu0 %783
        %v785 = vmax.f32 %v784, 0.0
        %v786 = vand.u32 2147483647, %v784
        %v787 = vsub.f32 0.0, %v786
        %v788 = vmul.f32 %v787, 1.442695
        %v789 = vpow.pop %v788
        %v790 = vadd.f32 %v789, 1.0
        %v791 = vlog2.pop %v790
        %v792 = vmul.f32 %v791, 0.6931472
        %v793 = vmul.f32 -0.5, %v789
        %v794 = vadd.f32 %v793, 1.0
        %v795 = vmul.f32 %v794, %v789
        %v796 = vand.u32 2147483647, %v789
        %vm797 = vcmp.lt.f32.partialorder %v796, 0.0004427343
        %v798 = vsel %vm797, %v795, %v792
        %v799 = vadd.f32 %v785, %v798
        %v800 = vsel %vm744, %v799, 0.0
        %v801 = vsel %vm768, %v800, 0.0
        %802 = vadd.xlane.f32.xlu0 %v801
        %v803 = vpop.xlane.xlu0 %802
        %v804 = vrot.slane %v803, 4
        %v805 = vadd.f32 %v803, %v804
        %v806 = vrot.slane %v805, 2
        %v807 = vadd.f32 %v805, %v806
        %v808 = vrot.slane %v807, 1
        %v809 = vadd.f32 %v807, %v808
        %s810 = vtos %v809
        %s811 = sadd.f32 %s779, %s810
        %v812 = vld [vmem:[#allocation3 + $0x10] sm:$0xff]
        %v813 = vmul.f32 %v812, %v739
        %v814 = vsel %vm747, %v813, 0.0
        %815 = vadd.xlane.f32.xlu0 %v814
        %v816 = vpop.xlane.xlu0 %815
        %v817 = vmax.f32 %v816, 0.0
        %v818 = vand.u32 2147483647, %v816
        %v819 = vsub.f32 0.0, %v818
        %v820 = vmul.f32 %v819, 1.442695
        %v821 = vpow.pop %v820
        %v822 = vadd.f32 %v821, 1.0
        %v823 = vlog2.pop %v822
        %v824 = vmul.f32 %v823, 0.6931472
        %v825 = vmul.f32 -0.5, %v821
        %v826 = vadd.f32 %v825, 1.0
        %v827 = vmul.f32 %v826, %v821
        %v828 = vand.u32 2147483647, %v821
        %vm829 = vcmp.lt.f32.partialorder %v828, 0.0004427343
        %v830 = vsel %vm829, %v827, %v824
        %v831 = vadd.f32 %v817, %v830
        %v832 = vsel %vm744, %v831, 0.0
        %v833 = vsel %vm768, %v832, 0.0
        %834 = vadd.xlane.f32.xlu0 %v833
        %v835 = vpop.xlane.xlu0 %834
        %v836 = vrot.slane %v835, 4
        %v837 = vadd.f32 %v835, %v836
        %v838 = vrot.slane %v837, 2
        %v839 = vadd.f32 %v837, %v838
        %v840 = vrot.slane %v839, 1
        %v841 = vadd.f32 %v839, %v840
        %s842 = vtos %v841
        %s843 = sadd.f32 %s811, %s842
        %v844 = vld [vmem:[#allocation3 + $0x18] sm:$0xff]
        %v845 = vmul.f32 %v844, %v739
        %v846 = vsel %vm747, %v845, 0.0
        %847 = vadd.xlane.f32.xlu0 %v846
        %v848 = vpop.xlane.xlu0 %847
        %v849 = vmax.f32 %v848, 0.0
        %v850 = vand.u32 2147483647, %v848
        %v851 = vsub.f32 0.0, %v850
        %v852 = vmul.f32 %v851, 1.442695
        %v853 = vpow.pop %v852
        %v854 = vadd.f32 %v853, 1.0
        %v855 = vlog2.pop %v854
        %v856 = vmul.f32 %v855, 0.6931472
        %v857 = vmul.f32 -0.5, %v853
        %v858 = vadd.f32 %v857, 1.0
        %v859 = vmul.f32 %v858, %v853
        %v860 = vand.u32 2147483647, %v853
        %vm861 = vcmp.lt.f32.partialorder %v860, 0.0004427343
        %v862 = vsel %vm861, %v859, %v856
        %v863 = vadd.f32 %v849, %v862
        %v864 = vsel %vm744, %v863, 0.0
        %v865 = vsel %vm768, %v864, 0.0
        %866 = vadd.xlane.f32.xlu0 %v865
        %v867 = vpop.xlane.xlu0 %866
        %v868 = vrot.slane %v867, 4
        %v869 = vadd.f32 %v867, %v868
        %v870 = vrot.slane %v869, 2
        %v871 = vadd.f32 %v869, %v870
        %v872 = vrot.slane %v871, 1
        %v873 = vadd.f32 %v871, %v872
        %s874 = vtos %v873
        %s875 = sadd.f32 %s843, %s874
        %v876 = vld [vmem:[#allocation3 + $0x20] sm:$0xff]
        %v877 = vmul.f32 %v876, %v739
        %v878 = vsel %vm747, %v877, 0.0
        %879 = vadd.xlane.f32.xlu0 %v878
        %v880 = vpop.xlane.xlu0 %879
        %v881 = vmax.f32 %v880, 0.0
        %v882 = vand.u32 2147483647, %v880
        %v883 = vsub.f32 0.0, %v882
        %v884 = vmul.f32 %v883, 1.442695
        %v885 = vpow.pop %v884
        %v886 = vadd.f32 %v885, 1.0
        %v887 = vlog2.pop %v886
        %v888 = vmul.f32 %v887, 0.6931472
        %v889 = vmul.f32 -0.5, %v885
        %v890 = vadd.f32 %v889, 1.0
        %v891 = vmul.f32 %v890, %v885
        %v892 = vand.u32 2147483647, %v885
        %vm893 = vcmp.lt.f32.partialorder %v892, 0.0004427343
        %v894 = vsel %vm893, %v891, %v888
        %v895 = vadd.f32 %v881, %v894
        %v896 = vsel %vm744, %v895, 0.0
        %v897 = vsel %vm768, %v896, 0.0
        %898 = vadd.xlane.f32.xlu0 %v897
        %v899 = vpop.xlane.xlu0 %898
        %v900 = vrot.slane %v899, 4
        %v901 = vadd.f32 %v899, %v900
        %v902 = vrot.slane %v901, 2
        %v903 = vadd.f32 %v901, %v902
        %v904 = vrot.slane %v903, 1
        %v905 = vadd.f32 %v903, %v904
        %s906 = vtos %v905
        %s907 = sadd.f32 %s875, %s906
        %v908 = vld [vmem:[#allocation3 + $0x28] sm:$0xff]
        %v909 = vmul.f32 %v908, %v739
        %v910 = vsel %vm747, %v909, 0.0
        %911 = vadd.xlane.f32.xlu0 %v910
        %v912 = vpop.xlane.xlu0 %911
        %v913 = vmax.f32 %v912, 0.0
        %v914 = vand.u32 2147483647, %v912
        %v915 = vsub.f32 0.0, %v914
        %v916 = vmul.f32 %v915, 1.442695
        %v917 = vpow.pop %v916
        %v918 = vadd.f32 %v917, 1.0
        %v919 = vlog2.pop %v918
        %v920 = vmul.f32 %v919, 0.6931472
        %v921 = vmul.f32 -0.5, %v917
        %v922 = vadd.f32 %v921, 1.0
        %v923 = vmul.f32 %v922, %v917
        %v924 = vand.u32 2147483647, %v917
        %vm925 = vcmp.lt.f32.partialorder %v924, 0.0004427343
        %v926 = vsel %vm925, %v923, %v920
        %v927 = vadd.f32 %v913, %v926
        %v928 = vsel %vm744, %v927, 0.0
        %v929 = vsel %vm768, %v928, 0.0
        %930 = vadd.xlane.f32.xlu0 %v929
        %v931 = vpop.xlane.xlu0 %930
        %v932 = vrot.slane %v931, 4
        %v933 = vadd.f32 %v931, %v932
        %v934 = vrot.slane %v933, 2
        %v935 = vadd.f32 %v933, %v934
        %v936 = vrot.slane %v935, 1
        %v937 = vadd.f32 %v935, %v936
        %s938 = vtos %v937
        %s939 = sadd.f32 %s907, %s938
        %v940 = vld [vmem:[#allocation3 + $0x30] sm:$0xff]
        %v941 = vmul.f32 %v940, %v739
        %v942 = vsel %vm747, %v941, 0.0
        %943 = vadd.xlane.f32.xlu0 %v942
        %v944 = vpop.xlane.xlu0 %943
        %v945 = vmax.f32 %v944, 0.0
        %v946 = vand.u32 2147483647, %v944
        %v947 = vsub.f32 0.0, %v946
        %v948 = vmul.f32 %v947, 1.442695
        %v949 = vpow.pop %v948
        %v950 = vadd.f32 %v949, 1.0
        %v951 = vlog2.pop %v950
        %v952 = vmul.f32 %v951, 0.6931472
        %v953 = vmul.f32 -0.5, %v949
        %v954 = vadd.f32 %v953, 1.0
        %v955 = vmul.f32 %v954, %v949
        %v956 = vand.u32 2147483647, %v949
        %vm957 = vcmp.lt.f32.partialorder %v956, 0.0004427343
        %v958 = vsel %vm957, %v955, %v952
        %v959 = vadd.f32 %v945, %v958
        %v960 = vsel %vm744, %v959, 0.0
        %v961 = vsel %vm768, %v960, 0.0
        %962 = vadd.xlane.f32.xlu0 %v961
        %v963 = vpop.xlane.xlu0 %962
        %v964 = vrot.slane %v963, 4
        %v965 = vadd.f32 %v963, %v964
        %v966 = vrot.slane %v965, 2
        %v967 = vadd.f32 %v965, %v966
        %v968 = vrot.slane %v967, 1
        %v969 = vadd.f32 %v967, %v968
        %s970 = vtos %v969
        %s971 = sadd.f32 %s939, %s970
        %v972 = vld [vmem:[#allocation3 + $0x38] sm:$0xff]
        %v973 = vmul.f32 %v972, %v739
        %v974 = vsel %vm747, %v973, 0.0
        %975 = vadd.xlane.f32.xlu0 %v974
        %v976 = vpop.xlane.xlu0 %975
        %v977 = vmax.f32 %v976, 0.0
        %v978 = vand.u32 2147483647, %v976
        %v979 = vsub.f32 0.0, %v978
        %v980 = vmul.f32 %v979, 1.442695
        %v981 = vpow.pop %v980
        %v982 = vadd.f32 %v981, 1.0
        %v983 = vlog2.pop %v982
        %v984 = vmul.f32 %v983, 0.6931472
        %v985 = vmul.f32 -0.5, %v981
        %v986 = vadd.f32 %v985, 1.0
        %v987 = vmul.f32 %v986, %v981
        %v988 = vand.u32 2147483647, %v981
        %vm989 = vcmp.lt.f32.partialorder %v988, 0.0004427343
        %v990 = vsel %vm989, %v987, %v984
        %v991 = vadd.f32 %v977, %v990
        %v992 = vsel %vm744, %v991, 0.0
        %v993 = vsel %vm768, %v992, 0.0
        %994 = vadd.xlane.f32.xlu0 %v993
        %v995 = vpop.xlane.xlu0 %994
        %v996 = vrot.slane %v995, 4
        %v997 = vadd.f32 %v995, %v996
        %v998 = vrot.slane %v997, 2
        %v999 = vadd.f32 %v997, %v998
        %v1000 = vrot.slane %v999, 1
        %v1001 = vadd.f32 %v999, %v1000
        %s1002 = vtos %v1001
        %s1003 = sadd.f32 %s971, %s1002
        %v1004 = vld [vmem:[#allocation3 + $0x40] sm:$0xff]
        %v1005 = vmul.f32 %v1004, %v739
        %v1006 = vsel %vm747, %v1005, 0.0
        %1007 = vadd.xlane.f32.xlu0 %v1006
        %v1008 = vpop.xlane.xlu0 %1007
        %v1009 = vmax.f32 %v1008, 0.0
        %v1010 = vand.u32 2147483647, %v1008
        %v1011 = vsub.f32 0.0, %v1010
        %v1012 = vmul.f32 %v1011, 1.442695
        %v1013 = vpow.pop %v1012
        %v1014 = vadd.f32 %v1013, 1.0
        %v1015 = vlog2.pop %v1014
        %v1016 = vmul.f32 %v1015, 0.6931472
        %v1017 = vmul.f32 -0.5, %v1013
        %v1018 = vadd.f32 %v1017, 1.0
        %v1019 = vmul.f32 %v1018, %v1013
        %v1020 = vand.u32 2147483647, %v1013
        %vm1021 = vcmp.lt.f32.partialorder %v1020, 0.0004427343
        %v1022 = vsel %vm1021, %v1019, %v1016
        %v1023 = vadd.f32 %v1009, %v1022
        %v1024 = vsel %vm744, %v1023, 0.0
        %v1025 = vsel %vm768, %v1024, 0.0
        %1026 = vadd.xlane.f32.xlu0 %v1025
        %v1027 = vpop.xlane.xlu0 %1026
        %v1028 = vrot.slane %v1027, 4
        %v1029 = vadd.f32 %v1027, %v1028
        %v1030 = vrot.slane %v1029, 2
        %v1031 = vadd.f32 %v1029, %v1030
        %v1032 = vrot.slane %v1031, 1
        %v1033 = vadd.f32 %v1031, %v1032
        %s1034 = vtos %v1033
        %s1035 = sadd.f32 %s1003, %s1034
        %s1036 = ssub.f32 0.0, %s1035
        %v1037 = vstv %s1036
        %1038 = vst [vmem:[%s59] sm:$0xff] %v1037
        %s1039 = sand.u32 %s32, 1
        %s1040 = scalar_lea.sflag [#allocation9], %s1039
        %s1041 = sand.u32 %s32, 1
        %s1042 = smul.addr %s1041, 8
        %s1043 = scalar_lea.vmem [#allocation8], %s1042
        // Predicated region
        $region417: #{tpu_custom_call.1} parent=11 // pred_check
          %p1044 = pneg %p38
        $region418: #{tpu_custom_call.1} parent=11 // pred_check_branch
          %1046 = sbr.rel (%p1044) target = $region420
        $region419: #{tpu_custom_call.1} parent=11 // pred_region
          %s1048 = ssub.s32 128, 128
          %1049 = vsyncadd %s1040, %s1048
          %s1050 = smul.addr %s23, 128
          %s1051 = scalar_lea.hbm %s4, %s1050
          %s1053 = sshll.u32 %s1043, 4
          %s1054 = int_to_ptr.vmem [resolvable:$true] %s1053
          %1056 = dma.vmem_to_hbm [thread:$0]  %s1054, 128, %s1051, %s1040
        $region420: #{tpu_custom_call.1} parent=11 // pred_fallthru
          _
      $region12: #{tpu_custom_call.1} parent=5 // pred_fallthru
        _
      %p1057 = scmp.le.s32.totalorder 1, %s23
      // Predicated region
      $region421: #{tpu_custom_call.1} parent=5 // pred_check
        %p1058 = pneg %p1057
      $region422: #{tpu_custom_call.1} parent=5 // pred_check_branch
        %1060 = sbr.rel (%p1058) target = $region424
      $region423: #{tpu_custom_call.1} parent=5 // pred_region
        %s1061 = ssub.s32 %s23, 1
        // Predicated region
        $region425: #{tpu_custom_call.1} parent=423 // pred_check
          %p1062 = pneg %p44
        $region426: #{tpu_custom_call.1} parent=423 // pred_check_branch
          %1064 = sbr.rel (%p1062) target = $region428
        $region427: #{tpu_custom_call.1} parent=423 // pred_region
          %s1065 = sand.u32 %s35, 1
          %s1066 = scalar_lea.sflag [#allocation9], %s1065
          %s1067 = sand.u32 %s35, 1
          %s1068 = smul.addr %s1067, 8
          %s1069 = scalar_lea.vmem [#allocation8], %s1068
          %1070 = dma.done %s1066, 128
        $region428: #{tpu_custom_call.1} parent=423 // pred_fallthru
          _
      $region424: #{tpu_custom_call.1} parent=5 // pred_fallthru
        _
    $region6: #{tpu_custom_call.1} parent=1 // loop_footer
      %s27 = sadd.s32 1, %s23
    $region7: #{tpu_custom_call.1} parent=1 // loop_footer_branch
      %22 = sbr.rel target = $region3
    $region8: #{tpu_custom_call.1} parent=1 // loop_exit
      _
    %1071 = vsyncpa [#allocation9], 1
    %s1072 = scalar_lea.sflag [#allocation9], 1
    %1073 = vsyncpa %s1072, 1
  %1074 = vsyncmov [#allocation4]
  %s1075 = vpop.sfrf %1074
  %p1076 = scmp.eq.s32.totalorder %s1075, 0
  %p1077 = pneg %p1076
  %1079 = shalt.err (%p1077)

</llo_original>
